<compile_context>
chip_gen: v7x
topology: tpu7x:2x2x1
jax: 0.10.0
libtpu: 0.0.40
codegen_flags: <defaults>
</compile_context>

<pallas_src>
import functools

import jax
import jax.numpy as jnp
from jax.experimental import pallas as pl
from jax.experimental.pallas import tpu as pltpu


_VMEM = pl.BlockSpec(memory_space=pltpu.MemorySpace.VMEM)


# --------------------------------------------------------------------- kernels
def _linear_kernel(x_ref, w_ref, b_ref, o_ref):
    # y = x @ W + b        x: [M, K], w: [K, A] (pre-transposed), b: [1, A]
    o_ref[...] = (
        jnp.dot(x_ref[...], w_ref[...], preferred_element_type=jnp.float32)
        + b_ref[...]
    )


def linear(x, w_t, b_row):
    """y = x @ w_t + b_row, with w_t [K, A] already transposed and b_row [1, A]."""
    M, K = x.shape
    A = w_t.shape[1]
    cost = pl.CostEstimate(
        flops=2 * M * K * A + M * A,
        transcendentals=0,
        bytes_accessed=4 * (M * K + K * A + A + M * A),
    )
    return pl.pallas_call(
        _linear_kernel,
        out_shape=jax.ShapeDtypeStruct((M, A), jnp.float32),
        in_specs=[_VMEM, _VMEM, _VMEM],
        out_specs=_VMEM,
        cost_estimate=cost,
    )(x, w_t, b_row)


def _attention_kernel(qT_ref, k_ref, v_ref, rscale_ref, *rest, apply_dropout):
    if apply_dropout:
        mask_ref, o_ref = rest
    else:
        (o_ref,) = rest

    # qT: [N, D, H]   k, v: [N, H, D]   (contraction over the head axis H)
    # qk[n,i,j] = sum_h qT[n,i,h] * k[n,h,j]  == torch.matmul(q.transpose(-2,-1), k)
    qk = jnp.einsum("nih,nhj->nij", qT_ref[...], k_ref[...],
                    preferred_element_type=jnp.float32)

    # scaled_qk = qk / inv_scale_factor, reciprocal precomputed outside the kernel
    scaled = qk * rscale_ref[...]                      # [1,D,D] broadcasts over N

    # softmax over the last dim
    m = jnp.max(scaled, axis=-1, keepdims=True)
    e = jnp.exp(scaled - m)
    # TODO(synk): pl.reciprocal(..., approx=True) would push this divide onto the
    # EUP, but it lacks an interpret-mode lowering, so keep the plain divide.
    p = e / jnp.sum(e, axis=-1, keepdims=True)

    if apply_dropout:
        # mask is {0, 1/(1-p)} drawn outside the kernel -> one fused multiply here
        p = p * mask_ref[...]

    # out[n,i,f] = sum_j p[n,i,j] * v[n,j,f]
    o_ref[...] = jnp.einsum("nij,njf->nif", p, v_ref[...],
                            preferred_element_type=jnp.float32)


def attention(qT, k, v, recip_scale, drop_mask=None):
    N, D, H = qT.shape
    F = v.shape[-1]
    apply_dropout = drop_mask is not None
    kern = functools.partial(_attention_kernel, apply_dropout=apply_dropout)
    inputs = [qT, k, v, recip_scale] + ([drop_mask] if apply_dropout else [])
    cost = pl.CostEstimate(
        flops=2 * N * D * H * D + 2 * N * D * D * F + 6 * N * D * D,
        transcendentals=N * D * D,
        bytes_accessed=4 * (sum(a.size for a in inputs) + N * D * F),
    )
    return pl.pallas_call(
        kern,
        out_shape=jax.ShapeDtypeStruct((N, D, F), jnp.float32),
        in_specs=[_VMEM] * len(inputs),
        out_specs=_VMEM,
        cost_estimate=cost,
    )(*inputs)


# ----------------------------------------------------------------------- model
class PallasModel:
    """JAX/Pallas port of the PyTorch Model(head_num, size_per_head)."""

    Q_IN, K_IN, V_IN, OUT = 5, 4, 6, 3

    def __init__(self, head_num, size_per_head, prng_key):
        assert head_num == size_per_head, (
            "reference forward is only shape-valid when head_num == size_per_head")
        self.head_num = head_num
        self.head_dim = size_per_head
        self.all_head_dim = head_num * size_per_head
        A = self.all_head_dim

        ks = jax.random.split(prng_key, 8)

        def init_linear(kw, kb, out_f, in_f):
            bound = 1.0 / float(in_f) ** 0.5       # torch nn.Linear default init
            w = jax.random.uniform(kw, (out_f, in_f), jnp.float32, -bound, bound)
            b = jax.random.uniform(kb, (out_f,), jnp.float32, -bound, bound)
            return w, b

        wq, bq = init_linear(ks[0], ks[1], A, self.Q_IN)
        wk, bk = init_linear(ks[2], ks[3], A, self.K_IN)
        wv, bv = init_linear(ks[4], ks[5], A, self.V_IN)
        wm, bm = init_linear(ks[6], ks[7], self.OUT, A)

        # Hoisted layout work (previously redone every forward):
        #  * block-diagonal fused QKV weight -> single MXU call, lane-dense output
        #  * pre-transposed merge weight, row-shaped biases
        kin = self.Q_IN + self.K_IN + self.V_IN
        w_qkv = jnp.zeros((kin, 3 * A), jnp.float32)
        w_qkv = w_qkv.at[: self.Q_IN, 0:A].set(wq.T)
        w_qkv = w_qkv.at[self.Q_IN: self.Q_IN + self.K_IN, A: 2 * A].set(wk.T)
        w_qkv = w_qkv.at[self.Q_IN + self.K_IN:, 2 * A:].set(wv.T)
        self.w_qkv = w_qkv                            # [15, 3*A]
        self.b_qkv = jnp.concatenate([bq, bk, bv]).reshape(1, 3 * A)
        self.wm_t = wm.T                              # [A, 3]
        self.bm_row = bm.reshape(1, self.OUT)

        self._forward = jax.jit(self._forward_impl, static_argnames=("dropout_p",))

    def __call__(self, query, key, value, inv_scale_factor, dropout_p, dropout_key):
        return self._forward(query, key, value, inv_scale_factor, dropout_key,
                             dropout_p=float(dropout_p))

    def _forward_impl(self, query, key, value, inv_scale_factor, dropout_key,
                      *, dropout_p):
        H, D, A = self.head_num, self.head_dim, self.all_head_dim

        # flatten leading dims so the linears act on the last feature dim
        q2 = query.reshape(-1, self.Q_IN)
        k2 = key.reshape(-1, self.K_IN)
        v2 = value.reshape(-1, self.V_IN)
        N = q2.shape[0]

        # ---- fused QKV projection: one block-diagonal matmul -----------------
        x_cat = jnp.concatenate([q2, k2, v2], axis=-1)        # [N, 15]
        qkv = linear(x_cat, self.w_qkv, self.b_qkv)           # [N, 3*A]

        # layout glue (tiny, jit-fused XLA ops): reshape(-1, H, D) per tensor,
        # plus q.transpose(-2, -1)
        qkv4 = qkv.reshape(N, 3, H, D)
        q3t = jnp.swapaxes(qkv4[:, 0], 1, 2)                  # [N, D, H]
        k3 = qkv4[:, 1]                                       # [N, H, D]
        v3 = qkv4[:, 2]                                       # [N, H, D]

        # scale: multiply by the reciprocal instead of dividing in-kernel
        recip_scale = (1.0 / inv_scale_factor).astype(jnp.float32)   # [1, D, D]

        # dropout (torch F.dropout default training=True); p == 0 fast path skips
        # both the PRNG draw and the in-kernel multiply.
        # TODO(synk): RNG stream is jax.random, not bit-identical to torch's.
        if dropout_p > 0.0:
            keep = jax.random.bernoulli(dropout_key, 1.0 - dropout_p, (N, D, D))
            drop_mask = keep.astype(jnp.float32) * (1.0 / (1.0 - dropout_p))
        else:
            drop_mask = None

        attn = attention(q3t, k3, v3, recip_scale, drop_mask)  # [N, D, D]

        # layout glue: transpose(-2, -1) + reshape(-1, all_head_dim)
        merged = jnp.swapaxes(attn, 1, 2).reshape(N, A)

        return linear(merged, self.wm_t, self.bm_row)           # [N, 3]


# ------------------------------------------------------------------------ main
if __name__ == "__main__":
    head_num, size_per_head = 8, 8   # must match for the reference forward to be shape-valid
    dropout_p = 0.1

    root = jax.random.PRNGKey(0)
    k_model, k_q, k_k, k_v, k_s, k_drop = jax.random.split(root, 6)

    model = PallasModel(head_num, size_per_head, k_model)

    query = jax.random.normal(k_q, (2, 4, 5), jnp.float32)     # last dim 5 -> linear_q
    key_t = jax.random.normal(k_k, (2, 4, 4), jnp.float32)     # last dim 4 -> linear_k
    value = jax.random.normal(k_v, (2, 4, 6), jnp.float32)     # last dim 6 -> linear_v
    inv_scale_factor = jax.random.normal(
        k_s, (1, size_per_head, size_per_head), jnp.float32)   # broadcasts over (N, D, D)

    out = model(query, key_t, value, inv_scale_factor, dropout_p, k_drop)
    out = jax.block_until_ready(out)
    assert out.shape == (8, 3) and out.dtype == jnp.float32
    print("KERNEL_OK")
</pallas_src>

<mosaic_0001>
module attributes {stable_mosaic.version = 11 : i64} {
  func.func @_linear_kernel(%arg0: memref<8x15xf32, #tpu.memory_space<vmem>>, %arg1: memref<15x192xf32, #tpu.memory_space<vmem>>, %arg2: memref<1x192xf32, #tpu.memory_space<vmem>>, %arg3: memref<8x192xf32, #tpu.memory_space<vmem>>) attributes {dimension_semantics = [], scalar_prefetch = 0 : i64, scratch_operands = 0 : i64, tpu.core_type = #tpu.core_type<tc>} {
    %c0 = arith.constant 0 : index
    %c0_0 = arith.constant 0 : index
    %0 = vector.load %arg0[%c0, %c0_0] : memref<8x15xf32, #tpu.memory_space<vmem>>, vector<8x15xf32>
    %c0_1 = arith.constant 0 : index
    %c0_2 = arith.constant 0 : index
    %1 = vector.load %arg1[%c0_1, %c0_2] : memref<15x192xf32, #tpu.memory_space<vmem>>, vector<15x192xf32>
    %cst = arith.constant dense<0.000000e+00> : vector<8x192xf32>
    %2 = tpu.matmul %0, %1, %cst {dimension_numbers = #tpu.dot_dimension_numbers<[1], [0], [0], [1], [0, 0, 1, 1], [], []>} : vector<8x15xf32>, vector<15x192xf32>, vector<8x192xf32> -> vector<8x192xf32>
    %c0_3 = arith.constant 0 : index
    %c0_4 = arith.constant 0 : index
    %3 = vector.load %arg2[%c0_3, %c0_4] : memref<1x192xf32, #tpu.memory_space<vmem>>, vector<1x192xf32>
    %4 = vector.broadcast %3 : vector<1x192xf32> to vector<8x192xf32>
    %5 = arith.addf %2, %4 : vector<8x192xf32>
    %c0_5 = arith.constant 0 : index
    %c0_6 = arith.constant 0 : index
    %6 = vector.load %arg3[%c0_5, %c0_6] : memref<8x192xf32, #tpu.memory_space<vmem>>, vector<8x192xf32>
    tpu.vector_store %arg3[%c0_5, %c0_6], %5 {strides = array<i32>} : memref<8x192xf32, #tpu.memory_space<vmem>>, vector<8x192xf32>,
    return
  }
}

module attributes {stable_mosaic.version = 11 : i64} {
  func.func @_linear_kernel(%arg0: memref<8x64xf32, #tpu.memory_space<vmem>>, %arg1: memref<64x3xf32, #tpu.memory_space<vmem>>, %arg2: memref<1x3xf32, #tpu.memory_space<vmem>>, %arg3: memref<8x3xf32, #tpu.memory_space<vmem>>) attributes {dimension_semantics = [], scalar_prefetch = 0 : i64, scratch_operands = 0 : i64, tpu.core_type = #tpu.core_type<tc>} {
    %c0 = arith.constant 0 : index
    %c0_0 = arith.constant 0 : index
    %0 = vector.load %arg0[%c0, %c0_0] : memref<8x64xf32, #tpu.memory_space<vmem>>, vector<8x64xf32>
    %c0_1 = arith.constant 0 : index
    %c0_2 = arith.constant 0 : index
    %1 = vector.load %arg1[%c0_1, %c0_2] : memref<64x3xf32, #tpu.memory_space<vmem>>, vector<64x3xf32>
    %cst = arith.constant dense<0.000000e+00> : vector<8x3xf32>
    %2 = tpu.matmul %0, %1, %cst {dimension_numbers = #tpu.dot_dimension_numbers<[1], [0], [0], [1], [0, 0, 1, 1], [], []>} : vector<8x64xf32>, vector<64x3xf32>, vector<8x3xf32> -> vector<8x3xf32>
    %c0_3 = arith.constant 0 : index
    %c0_4 = arith.constant 0 : index
    %3 = vector.load %arg2[%c0_3, %c0_4] : memref<1x3xf32, #tpu.memory_space<vmem>>, vector<1x3xf32>
    %4 = vector.broadcast %3 : vector<1x3xf32> to vector<8x3xf32>
    %5 = arith.addf %2, %4 : vector<8x3xf32>
    %c0_5 = arith.constant 0 : index
    %c0_6 = arith.constant 0 : index
    %6 = vector.load %arg3[%c0_5, %c0_6] : memref<8x3xf32, #tpu.memory_space<vmem>>, vector<8x3xf32>
    tpu.vector_store %arg3[%c0_5, %c0_6], %5 {strides = array<i32>} : memref<8x3xf32, #tpu.memory_space<vmem>>, vector<8x3xf32>,
    return
  }
}

module attributes {stable_mosaic.version = 11 : i64} {
  func.func @_attention_kernel(%arg0: memref<8x8x8xf32, #tpu.memory_space<vmem>>, %arg1: memref<8x8x8xf32, #tpu.memory_space<vmem>>, %arg2: memref<8x8x8xf32, #tpu.memory_space<vmem>>, %arg3: memref<1x8x8xf32, #tpu.memory_space<vmem>>, %arg4: memref<8x8x8xf32, #tpu.memory_space<vmem>>, %arg5: memref<8x8x8xf32, #tpu.memory_space<vmem>>) attributes {dimension_semantics = [], scalar_prefetch = 0 : i64, scratch_operands = 0 : i64, tpu.core_type = #tpu.core_type<tc>} {
    %c0 = arith.constant 0 : index
    %c0_0 = arith.constant 0 : index
    %c0_1 = arith.constant 0 : index
    %0 = vector.load %arg0[%c0, %c0_0, %c0_1] : memref<8x8x8xf32, #tpu.memory_space<vmem>>, vector<8x8x8xf32>
    %c0_2 = arith.constant 0 : index
    %c0_3 = arith.constant 0 : index
    %c0_4 = arith.constant 0 : index
    %1 = vector.load %arg1[%c0_2, %c0_3, %c0_4] : memref<8x8x8xf32, #tpu.memory_space<vmem>>, vector<8x8x8xf32>
    "tpu.trace_start"() <{level = 10 : i32, message = "nih,nhj->nij"}> : () -> ()
    %cst = arith.constant dense<0.000000e+00> : vector<8x8x8xf32>
    %2 = tpu.matmul %0, %1, %cst {dimension_numbers = #tpu.dot_dimension_numbers<[2], [1], [1], [2], [0, 0, 0, 1, 1, 2], [0], [0]>} : vector<8x8x8xf32>, vector<8x8x8xf32>, vector<8x8x8xf32> -> vector<8x8x8xf32>
    "tpu.trace_stop"() : () -> ()
    %c0_5 = arith.constant 0 : index
    %c0_6 = arith.constant 0 : index
    %c0_7 = arith.constant 0 : index
    %3 = vector.load %arg3[%c0_5, %c0_6, %c0_7] : memref<1x8x8xf32, #tpu.memory_space<vmem>>, vector<1x8x8xf32>
    %4 = vector.broadcast %3 : vector<1x8x8xf32> to vector<8x8x8xf32>
    %5 = arith.mulf %2, %4 : vector<8x8x8xf32>
    %cst_8 = arith.constant dense<0xFF800000> : vector<8x8xf32>
    %6 = vector.multi_reduction <maximumf>, %5, %cst_8 [2] : vector<8x8x8xf32> to vector<8x8xf32>
    %7 = vector.shape_cast %6 : vector<8x8xf32> to vector<8x8x1xf32>
    %8 = vector.broadcast %7 : vector<8x8x1xf32> to vector<8x8x8xf32>
    %9 = arith.subf %5, %8 : vector<8x8x8xf32>
    %10 = math.exp %9 : vector<8x8x8xf32>
    %cst_9 = arith.constant dense<0.000000e+00> : vector<8x8xf32>
    %11 = vector.multi_reduction <add>, %10, %cst_9 [2] : vector<8x8x8xf32> to vector<8x8xf32>
    %12 = vector.shape_cast %11 : vector<8x8xf32> to vector<8x8x1xf32>
    %13 = vector.broadcast %12 : vector<8x8x1xf32> to vector<8x8x8xf32>
    %14 = arith.divf %10, %13 : vector<8x8x8xf32>
    %c0_10 = arith.constant 0 : index
    %c0_11 = arith.constant 0 : index
    %c0_12 = arith.constant 0 : index
    %15 = vector.load %arg4[%c0_10, %c0_11, %c0_12] : memref<8x8x8xf32, #tpu.memory_space<vmem>>, vector<8x8x8xf32>
    %16 = arith.mulf %14, %15 : vector<8x8x8xf32>
    %c0_13 = arith.constant 0 : index
    %c0_14 = arith.constant 0 : index
    %c0_15 = arith.constant 0 : index
    %17 = vector.load %arg2[%c0_13, %c0_14, %c0_15] : memref<8x8x8xf32, #tpu.memory_space<vmem>>, vector<8x8x8xf32>
    "tpu.trace_start"() <{level = 10 : i32, message = "nij,njf->nif"}> : () -> ()
    %cst_16 = arith.constant dense<0.000000e+00> : vector<8x8x8xf32>
    %18 = tpu.matmul %16, %17, %cst_16 {dimension_numbers = #tpu.dot_dimension_numbers<[2], [1], [1], [2], [0, 0, 0, 1, 1, 2], [0], [0]>} : vector<8x8x8xf32>, vector<8x8x8xf32>, vector<8x8x8xf32> -> vector<8x8x8xf32>
    "tpu.trace_stop"() : () -> ()
    %c0_17 = arith.constant 0 : index
    %c0_18 = arith.constant 0 : index
    %c0_19 = arith.constant 0 : index
    %19 = vector.load %arg5[%c0_17, %c0_18, %c0_19] : memref<8x8x8xf32, #tpu.memory_space<vmem>>, vector<8x8x8xf32>
    tpu.vector_store %arg5[%c0_17, %c0_18, %c0_19], %18 {strides = array<i32>} : memref<8x8x8xf32, #tpu.memory_space<vmem>>, vector<8x8x8xf32>,
    return
  }
}

</mosaic_0001>

<llo_original>
// kernel: _forward_impl.3
$region0: #{_forward_impl.3}
  #allocation0 [shape = 'u32[]', space=smem, size = 0x4, offset = 0x4, fixed_abs, tag = 'smem constant byte address 0x4 - core index']
  #allocation1 [shape = 'u32[144,128]{1,0:T(1,128)}', space=vmem, size = 0x12000, scoped, tag = 'internal scratch']
  %s0 = inlined_call_operand.vmem [shape: f32[8,15], index: 0, kind: input, shape index: {}]
  %s1 = inlined_call_operand.vmem [shape: f32[15,192], index: 1, kind: input, shape index: {}]
  %s2 = inlined_call_operand.vmem [shape: f32[1,192], index: 2, kind: input, shape index: {}]
  %s3 = inlined_call_operand.vmem [shape: f32[8,192], index: 3, kind: output, shape index: {}]
  %s4 = sld [smem:[#allocation0]]
  $region22: #{_forward_impl.3} parent=0
    _
  %s6 = ssub.s32 1, %s4
  %s7 = scalar_select 0, %s6, %s4
  // Predicated region
  $region2: #{_forward_impl.3} parent=0 // pred_check
    _
  $region3: #{_forward_impl.3} parent=0 // pred_check_branch
    %9 = sbr.rel (0) target = $region5
  $region4: #{_forward_impl.3} parent=0 // pred_region
    _
  $region5: #{_forward_impl.3} parent=0 // pred_fallthru
    _
  // Predicated region
  $region6: #{_forward_impl.3} parent=0 // pred_check
    _
  $region7: #{_forward_impl.3} parent=0 // pred_check_branch
    %11 = sbr.rel (0) target = $region9
  $region8: #{_forward_impl.3} parent=0 // pred_region
    _
  $region9: #{_forward_impl.3} parent=0 // pred_fallthru
    _
  // Predicated region
  $region10: #{_forward_impl.3} parent=0 // pred_check
    _
  $region11: #{_forward_impl.3} parent=0 // pred_check_branch
    %13 = sbr.rel (0) target = $region13
  $region12: #{_forward_impl.3} parent=0 // pred_region
    _
  $region13: #{_forward_impl.3} parent=0 // pred_fallthru
    _
  %v14 = vld [vmem:[%s0] sm:$0xff]
  %v15 = vld [vmem:[%s1] sm:$0xff]
  %v16 = vld [vmem:[%s1 + $0x8] sm:$0xff]
  %v17 = vld [vmem:[%s1 + $0x10] sm:$0x7f]
  %v18 = vld [vmem:[%s1 + $0x18] sm:$0x7f]
  %v19 = vld [vmem:[%s2] sm:$0x3]
  %v21 = vlaneseq
  %v22 = vshrl.u32 %v21, 7
  %v23 = vsub.s32 0, %v22
  %v24 = vrot.slane %v19, %v23
  %v25 = vlaneseq
  %v26 = vshrl.u32 %v25, 7
  %v27 = vsub.s32 1, %v26
  %v28 = vrot.slane %v19, %v27
  %vm31 = vcmask 121856
  %v33 = vsel %vm31, %v14, 0
  %vm35 = vcmask 1046528
  %v37 = vsel %vm35, %v17, 0
  %v40 = vsel %vm35, %v18, 0
  %42 = vmatprep.subr.mxu0 %v16
  %43 = vmatpush1.msra.mxu0 %v15
  %44 = vmatprep.subr.mxu0 %v40
  %45 = vmatpush1.msra.mxu0 %v37
  %46 = vmatprep.subr.mxu0 0.0
  %47 = vmatpush1.msra.mxu0 0.0
  %48 = vmatprep.subr.mxu0 0.0
  %49 = vmatpush1.msra.mxu0 0.0
  %50 = vmatprep.subr.mxu0 0.0
  %51 = vmatpush1.msra.mxu0 0.0
  %52 = vmatprep.subr.mxu0 0.0
  %53 = vmatpush1.msra.mxu0 0.0
  %54 = vmatprep.subr.mxu0 0.0
  %55 = vmatpush1.msra.mxu0 0.0
  %56 = vmatprep.subr.mxu0 0.0
  %57 = vmatpush1.msra.mxu0 0.0
  %58 = vmatprep.subr.mxu0 0.0
  %59 = vmatpush1.msra.mxu0 0.0
  %60 = vmatprep.subr.mxu0 0.0
  %61 = vmatpush1.msra.mxu0 0.0
  %62 = vmatprep.subr.mxu0 0.0
  %63 = vmatpush1.msra.mxu0 0.0
  %64 = vmatprep.subr.mxu0 0.0
  %65 = vmatpush1.msra.mxu0 0.0
  %66 = vmatprep.subr.mxu0 0.0
  %67 = vmatpush1.msra.mxu0 0.0
  %68 = vmatprep.subr.mxu0 0.0
  %69 = vmatpush1.msra.mxu0 0.0
  %70 = vmatprep.subr.mxu0 0.0
  %71 = vmatpush1.msra.mxu0 0.0
  %72 = vmatprep.subr.mxu0 0.0
  %73 = vmatpush1.msra.mxu0 0.0
  %74 = vmatprep.subr.mxu0 0.0
  %75 = vmatpush1.msra.mxu0 0.0
  %76 = vmatprep.subr.mxu0 0.0
  %77 = vmatpush1.msra.mxu0 0.0
  %78 = vmatprep.subr.mxu0 0.0
  %79 = vmatpush1.msra.mxu0 0.0
  %80 = vmatprep.subr.mxu0 0.0
  %81 = vmatpush1.msra.mxu0 0.0
  %82 = vmatprep.subr.mxu0 0.0
  %83 = vmatpush1.msra.mxu0 0.0
  %84 = vmatprep.subr.mxu0 0.0
  %85 = vmatpush1.msra.mxu0 0.0
  %86 = vmatprep.subr.mxu0 0.0
  %87 = vmatpush1.msra.mxu0 0.0
  %88 = vmatprep.subr.mxu0 0.0
  %89 = vmatpush1.msra.mxu0 0.0
  %90 = vmatprep.subr.mxu0 0.0
  %91 = vmatpush1.msra.mxu0 0.0
  %92 = vmatprep.subr.mxu0 0.0
  %93 = vmatpush1.msra.mxu0 0.0
  %94 = vmatprep.subr.mxu0 0.0
  %95 = vmatpush1.msra.mxu0 0.0
  %96 = vmatprep.subr.mxu0 0.0
  %97 = vmatpush1.msra.mxu0 0.0
  %98 = vmatprep.subr.mxu0 0.0
  %99 = vmatpush1.msra.mxu0 0.0
  %100 = vmatprep.subr.mxu0 0.0
  %101 = vmatpush1.msra.mxu0 0.0
  %102 = vmatprep.subr.mxu0 0.0
  %103 = vmatpush1.msra.mxu0 0.0
  %104 = vmatprep.subr.mxu0 0.0
  %105 = vmatpush1.msra.mxu0 0.0
  %106 = vmatprep.mubr.f32.mxu0 0.0
  %107 = vmatmul.mubr.f32.gmra.mrb[0].mxu0 %v33
  %v108 = vpop.f32.mrb[0].mxu0
  %v109 = vadd.f32 %v24, %v108
  %v110 = vpop.f32.mrb[0].mxu0
  %v111 = vadd.f32 %v28, %v110
  %112 = vdwg.mxu0
  %113 = vst [vmem:[%s3] sm:$0xff] %v109
  %vm114 = vcmask 523264
  %115 = vst.msk [vmem:[%s3 + $0x8] sm:$0xff] %vm114, %v111
  // Predicated region
  $region14: #{_forward_impl.3} parent=0 // pred_check
    _
  $region15: #{_forward_impl.3} parent=0 // pred_check_branch
    %117 = sbr.rel (0) target = $region17
  $region16: #{_forward_impl.3} parent=0 // pred_region
    _
  $region17: #{_forward_impl.3} parent=0 // pred_fallthru
    _
  // Predicated region
  $region18: #{_forward_impl.3} parent=0 // pred_check
    _
  $region19: #{_forward_impl.3} parent=0 // pred_check_branch
    %119 = sbr.rel (0) target = $region21
  $region20: #{_forward_impl.3} parent=0 // pred_region
    _
  $region21: #{_forward_impl.3} parent=0 // pred_fallthru
    _

// kernel: _forward_impl.5
$region0: #{_forward_impl.5}
  #allocation0 [shape = 'u32[]', space=smem, size = 0x4, offset = 0x4, fixed_abs, tag = 'smem constant byte address 0x4 - core index']
  #allocation1 [shape = 'u32[144,128]{1,0:T(1,128)}', space=vmem, size = 0x12000, scoped, tag = 'internal scratch']
  %s0 = inlined_call_operand.vmem [shape: f32[8,64], index: 0, kind: input, shape index: {}]
  %s1 = inlined_call_operand.vmem [shape: f32[64,3], index: 1, kind: input, shape index: {}]
  %s2 = inlined_call_operand.vmem [shape: f32[1,3], index: 2, kind: input, shape index: {}]
  %s3 = inlined_call_operand.vmem [shape: f32[8,3], index: 3, kind: output, shape index: {}]
  %s4 = sld [smem:[#allocation0]]
  $region22: #{_forward_impl.5} parent=0
    _
  %s6 = ssub.s32 1, %s4
  %s7 = scalar_select 0, %s6, %s4
  // Predicated region
  $region2: #{_forward_impl.5} parent=0 // pred_check
    _
  $region3: #{_forward_impl.5} parent=0 // pred_check_branch
    %9 = sbr.rel (0) target = $region5
  $region4: #{_forward_impl.5} parent=0 // pred_region
    _
  $region5: #{_forward_impl.5} parent=0 // pred_fallthru
    _
  // Predicated region
  $region6: #{_forward_impl.5} parent=0 // pred_check
    _
  $region7: #{_forward_impl.5} parent=0 // pred_check_branch
    %11 = sbr.rel (0) target = $region9
  $region8: #{_forward_impl.5} parent=0 // pred_region
    _
  $region9: #{_forward_impl.5} parent=0 // pred_fallthru
    _
  // Predicated region
  $region10: #{_forward_impl.5} parent=0 // pred_check
    _
  $region11: #{_forward_impl.5} parent=0 // pred_check_branch
    %13 = sbr.rel (0) target = $region13
  $region12: #{_forward_impl.5} parent=0 // pred_region
    _
  $region13: #{_forward_impl.5} parent=0 // pred_fallthru
    _
  %v14 = vld [vmem:[%s0] sm:$0xff]
  %v15 = vld [vmem:[%s1] sm:$0xff]
  %v16 = vld [vmem:[%s1 + $0x8] sm:$0xff]
  %v17 = vld [vmem:[%s1 + $0x10] sm:$0xff]
  %v18 = vld [vmem:[%s1 + $0x18] sm:$0xff]
  %v19 = vld [vmem:[%s1 + $0x20] sm:$0xff]
  %v20 = vld [vmem:[%s1 + $0x28] sm:$0xff]
  %v21 = vld [vmem:[%s1 + $0x30] sm:$0xff]
  %v22 = vld [vmem:[%s1 + $0x38] sm:$0xff]
  %v23 = vld [vmem:[%s2] sm:$0x1]
  %v25 = vlaneseq
  %v26 = vshrl.u32 %v25, 7
  %v27 = vsub.s32 0, %v26
  %v28 = vrot.slane %v23, %v27
  %vm30 = vcmask 523264
  %v32 = vsel %vm30, %v14, 0
  %34 = vmatprep.subr.mxu0 0.0
  %35 = vmatpush1.msra.mxu0 %v15
  %36 = vmatprep.subr.mxu0 0.0
  %37 = vmatpush1.msra.mxu0 %v16
  %38 = vmatprep.subr.mxu0 0.0
  %39 = vmatpush1.msra.mxu0 %v17
  %40 = vmatprep.subr.mxu0 0.0
  %41 = vmatpush1.msra.mxu0 %v18
  %42 = vmatprep.subr.mxu0 0.0
  %43 = vmatpush1.msra.mxu0 %v19
  %44 = vmatprep.subr.mxu0 0.0
  %45 = vmatpush1.msra.mxu0 %v20
  %46 = vmatprep.subr.mxu0 0.0
  %47 = vmatpush1.msra.mxu0 %v21
  %48 = vmatprep.subr.mxu0 0.0
  %49 = vmatpush1.msra.mxu0 %v22
  %50 = vmatprep.subr.mxu0 0.0
  %51 = vmatpush1.msra.mxu0 0.0
  %52 = vmatprep.subr.mxu0 0.0
  %53 = vmatpush1.msra.mxu0 0.0
  %54 = vmatprep.subr.mxu0 0.0
  %55 = vmatpush1.msra.mxu0 0.0
  %56 = vmatprep.subr.mxu0 0.0
  %57 = vmatpush1.msra.mxu0 0.0
  %58 = vmatprep.subr.mxu0 0.0
  %59 = vmatpush1.msra.mxu0 0.0
  %60 = vmatprep.subr.mxu0 0.0
  %61 = vmatpush1.msra.mxu0 0.0
  %62 = vmatprep.subr.mxu0 0.0
  %63 = vmatpush1.msra.mxu0 0.0
  %64 = vmatprep.subr.mxu0 0.0
  %65 = vmatpush1.msra.mxu0 0.0
  %66 = vmatprep.subr.mxu0 0.0
  %67 = vmatpush1.msra.mxu0 0.0
  %68 = vmatprep.subr.mxu0 0.0
  %69 = vmatpush1.msra.mxu0 0.0
  %70 = vmatprep.subr.mxu0 0.0
  %71 = vmatpush1.msra.mxu0 0.0
  %72 = vmatprep.subr.mxu0 0.0
  %73 = vmatpush1.msra.mxu0 0.0
  %74 = vmatprep.subr.mxu0 0.0
  %75 = vmatpush1.msra.mxu0 0.0
  %76 = vmatprep.subr.mxu0 0.0
  %77 = vmatpush1.msra.mxu0 0.0
  %78 = vmatprep.subr.mxu0 0.0
  %79 = vmatpush1.msra.mxu0 0.0
  %80 = vmatprep.subr.mxu0 0.0
  %81 = vmatpush1.msra.mxu0 0.0
  %82 = vmatprep.subr.mxu0 0.0
  %83 = vmatpush1.msra.mxu0 0.0
  %84 = vmatprep.subr.mxu0 0.0
  %85 = vmatpush1.msra.mxu0 0.0
  %86 = vmatprep.subr.mxu0 0.0
  %87 = vmatpush1.msra.mxu0 0.0
  %88 = vmatprep.subr.mxu0 0.0
  %89 = vmatpush1.msra.mxu0 0.0
  %90 = vmatprep.subr.mxu0 0.0
  %91 = vmatpush1.msra.mxu0 0.0
  %92 = vmatprep.subr.mxu0 0.0
  %93 = vmatpush1.msra.mxu0 0.0
  %94 = vmatprep.subr.mxu0 0.0
  %95 = vmatpush1.msra.mxu0 0.0
  %96 = vmatprep.subr.mxu0 0.0
  %97 = vmatpush1.msra.mxu0 0.0
  %98 = vmatprep.mubr.f32.mxu0 0.0
  %99 = vmatmul.mubr.f32.gmra.mrb[0].mxu0 %v32
  %v100 = vpop.f32.mrb[0].mxu0
  %v101 = vadd.f32 %v28, %v100
  %v102 = vpop.f32.mrb[0].mxu0
  %103 = vdwg.mxu0
  %vm104 = vcmask 23552
  %105 = vst.msk [vmem:[%s3] sm:$0xff] %vm104, %v101
  // Predicated region
  $region14: #{_forward_impl.5} parent=0 // pred_check
    _
  $region15: #{_forward_impl.5} parent=0 // pred_check_branch
    %107 = sbr.rel (0) target = $region17
  $region16: #{_forward_impl.5} parent=0 // pred_region
    _
  $region17: #{_forward_impl.5} parent=0 // pred_fallthru
    _
  // Predicated region
  $region18: #{_forward_impl.5} parent=0 // pred_check
    _
  $region19: #{_forward_impl.5} parent=0 // pred_check_branch
    %109 = sbr.rel (0) target = $region21
  $region20: #{_forward_impl.5} parent=0 // pred_region
    _
  $region21: #{_forward_impl.5} parent=0 // pred_fallthru
    _

// kernel: _forward_impl.4
$region0: #{_forward_impl.4}
  #allocation0 [shape = 'u32[]', space=smem, size = 0x4, offset = 0x4, fixed_abs, tag = 'smem constant byte address 0x4 - core index']
  #allocation1 [shape = 'u32[144,128]{1,0:T(1,128)}', space=vmem, size = 0x12000, scoped, tag = 'internal scratch']
  %s0 = inlined_call_operand.vmem [shape: f32[8,8,8], index: 0, kind: input, shape index: {}]
  %s1 = inlined_call_operand.vmem [shape: f32[8,8,8], index: 1, kind: input, shape index: {}]
  %s2 = inlined_call_operand.vmem [shape: f32[8,8,8], index: 2, kind: input, shape index: {}]
  %s3 = inlined_call_operand.vmem [shape: f32[1,8,8], index: 3, kind: input, shape index: {}]
  %s4 = inlined_call_operand.vmem [shape: f32[8,8,8], index: 4, kind: input, shape index: {}]
  %s5 = inlined_call_operand.vmem [shape: f32[8,8,8], index: 5, kind: output, shape index: {}]
  %s6 = sld [smem:[#allocation0]]
  $region30: #{_forward_impl.4} parent=0
    _
  %s8 = ssub.s32 1, %s6
  %s9 = scalar_select 0, %s8, %s6
  // Predicated region
  $region2: #{_forward_impl.4} parent=0 // pred_check
    _
  $region3: #{_forward_impl.4} parent=0 // pred_check_branch
    %11 = sbr.rel (0) target = $region5
  $region4: #{_forward_impl.4} parent=0 // pred_region
    _
  $region5: #{_forward_impl.4} parent=0 // pred_fallthru
    _
  // Predicated region
  $region6: #{_forward_impl.4} parent=0 // pred_check
    _
  $region7: #{_forward_impl.4} parent=0 // pred_check_branch
    %13 = sbr.rel (0) target = $region9
  $region8: #{_forward_impl.4} parent=0 // pred_region
    _
  $region9: #{_forward_impl.4} parent=0 // pred_fallthru
    _
  // Predicated region
  $region10: #{_forward_impl.4} parent=0 // pred_check
    _
  $region11: #{_forward_impl.4} parent=0 // pred_check_branch
    %15 = sbr.rel (0) target = $region13
  $region12: #{_forward_impl.4} parent=0 // pred_region
    _
  $region13: #{_forward_impl.4} parent=0 // pred_fallthru
    _
  // Predicated region
  $region14: #{_forward_impl.4} parent=0 // pred_check
    _
  $region15: #{_forward_impl.4} parent=0 // pred_check_branch
    %17 = sbr.rel (0) target = $region17
  $region16: #{_forward_impl.4} parent=0 // pred_region
    _
  $region17: #{_forward_impl.4} parent=0 // pred_fallthru
    _
  // Predicated region
  $region18: #{_forward_impl.4} parent=0 // pred_check
    _
  $region19: #{_forward_impl.4} parent=0 // pred_check_branch
    %19 = sbr.rel (0) target = $region21
  $region20: #{_forward_impl.4} parent=0 // pred_region
    _
  $region21: #{_forward_impl.4} parent=0 // pred_fallthru
    _
  %v20 = vld [vmem:[%s0] sm:$0xff]
  %v21 = vld [vmem:[%s0 + $0x8] sm:$0xff]
  %v22 = vld [vmem:[%s0 + $0x10] sm:$0xff]
  %v23 = vld [vmem:[%s0 + $0x18] sm:$0xff]
  %v24 = vld [vmem:[%s0 + $0x20] sm:$0xff]
  %v25 = vld [vmem:[%s0 + $0x28] sm:$0xff]
  %v26 = vld [vmem:[%s0 + $0x30] sm:$0xff]
  %v27 = vld [vmem:[%s0 + $0x38] sm:$0xff]
  %v28 = vld [vmem:[%s1] sm:$0xff]
  %v29 = vld [vmem:[%s1 + $0x8] sm:$0xff]
  %v30 = vld [vmem:[%s1 + $0x10] sm:$0xff]
  %v31 = vld [vmem:[%s1 + $0x18] sm:$0xff]
  %v32 = vld [vmem:[%s1 + $0x20] sm:$0xff]
  %v33 = vld [vmem:[%s1 + $0x28] sm:$0xff]
  %v34 = vld [vmem:[%s1 + $0x30] sm:$0xff]
  %v35 = vld [vmem:[%s1 + $0x38] sm:$0xff]
  %vm36 = vcmask 64512
  %v38 = vsel %vm36, %v20, 0
  %40 = vmatprep.subr.mxu0 0.0
  %41 = vmatpush1.msra.mxu0 %v28
  %42 = vmatprep.subr.mxu0 0.0
  %43 = vmatpush1.msra.mxu0 0.0
  %44 = vmatprep.subr.mxu0 0.0
  %45 = vmatpush1.msra.mxu0 0.0
  %46 = vmatprep.subr.mxu0 0.0
  %47 = vmatpush1.msra.mxu0 0.0
  %48 = vmatprep.subr.mxu0 0.0
  %49 = vmatpush1.msra.mxu0 0.0
  %50 = vmatprep.subr.mxu0 0.0
  %51 = vmatpush1.msra.mxu0 0.0
  %52 = vmatprep.subr.mxu0 0.0
  %53 = vmatpush1.msra.mxu0 0.0
  %54 = vmatprep.subr.mxu0 0.0
  %55 = vmatpush1.msra.mxu0 0.0
  %56 = vmatprep.subr.mxu0 0.0
  %57 = vmatpush1.msra.mxu0 0.0
  %58 = vmatprep.subr.mxu0 0.0
  %59 = vmatpush1.msra.mxu0 0.0
  %60 = vmatprep.subr.mxu0 0.0
  %61 = vmatpush1.msra.mxu0 0.0
  %62 = vmatprep.subr.mxu0 0.0
  %63 = vmatpush1.msra.mxu0 0.0
  %64 = vmatprep.subr.mxu0 0.0
  %65 = vmatpush1.msra.mxu0 0.0
  %66 = vmatprep.subr.mxu0 0.0
  %67 = vmatpush1.msra.mxu0 0.0
  %68 = vmatprep.subr.mxu0 0.0
  %69 = vmatpush1.msra.mxu0 0.0
  %70 = vmatprep.subr.mxu0 0.0
  %71 = vmatpush1.msra.mxu0 0.0
  %72 = vmatprep.subr.mxu0 0.0
  %73 = vmatpush1.msra.mxu0 0.0
  %74 = vmatprep.subr.mxu0 0.0
  %75 = vmatpush1.msra.mxu0 0.0
  %76 = vmatprep.subr.mxu0 0.0
  %77 = vmatpush1.msra.mxu0 0.0
  %78 = vmatprep.subr.mxu0 0.0
  %79 = vmatpush1.msra.mxu0 0.0
  %80 = vmatprep.subr.mxu0 0.0
  %81 = vmatpush1.msra.mxu0 0.0
  %82 = vmatprep.subr.mxu0 0.0
  %83 = vmatpush1.msra.mxu0 0.0
  %84 = vmatprep.subr.mxu0 0.0
  %85 = vmatpush1.msra.mxu0 0.0
  %86 = vmatprep.subr.mxu0 0.0
  %87 = vmatpush1.msra.mxu0 0.0
  %88 = vmatprep.subr.mxu0 0.0
  %89 = vmatpush1.msra.mxu0 0.0
  %90 = vmatprep.subr.mxu0 0.0
  %91 = vmatpush1.msra.mxu0 0.0
  %92 = vmatprep.subr.mxu0 0.0
  %93 = vmatpush1.msra.mxu0 0.0
  %94 = vmatprep.subr.mxu0 0.0
  %95 = vmatpush1.msra.mxu0 0.0
  %96 = vmatprep.subr.mxu0 0.0
  %97 = vmatpush1.msra.mxu0 0.0
  %98 = vmatprep.subr.mxu0 0.0
  %99 = vmatpush1.msra.mxu0 0.0
  %100 = vmatprep.subr.mxu0 0.0
  %101 = vmatpush1.msra.mxu0 0.0
  %102 = vmatprep.subr.mxu0 0.0
  %103 = vmatpush1.msra.mxu0 0.0
  %104 = vmatprep.mubr.f32.mxu0 0.0
  %105 = vmatmul.mubr.f32.gmra.mrb[0].mxu0 %v38
  %v106 = vpop.f32.mrb[0].mxu0
  %v107 = vadd.f32 0.0, %v106
  %v108 = vpop.f32.mrb[0].mxu0
  %109 = vdwg.mxu0
  %v111 = vsel %vm36, %v21, 0
  %113 = vmatprep.subr.mxu0 0.0
  %114 = vmatpush1.msra.mxu0 %v29
  %115 = vmatprep.subr.mxu0 0.0
  %116 = vmatpush1.msra.mxu0 0.0
  %117 = vmatprep.subr.mxu0 0.0
  %118 = vmatpush1.msra.mxu0 0.0
  %119 = vmatprep.subr.mxu0 0.0
  %120 = vmatpush1.msra.mxu0 0.0
  %121 = vmatprep.subr.mxu0 0.0
  %122 = vmatpush1.msra.mxu0 0.0
  %123 = vmatprep.subr.mxu0 0.0
  %124 = vmatpush1.msra.mxu0 0.0
  %125 = vmatprep.subr.mxu0 0.0
  %126 = vmatpush1.msra.mxu0 0.0
  %127 = vmatprep.subr.mxu0 0.0
  %128 = vmatpush1.msra.mxu0 0.0
  %129 = vmatprep.subr.mxu0 0.0
  %130 = vmatpush1.msra.mxu0 0.0
  %131 = vmatprep.subr.mxu0 0.0
  %132 = vmatpush1.msra.mxu0 0.0
  %133 = vmatprep.subr.mxu0 0.0
  %134 = vmatpush1.msra.mxu0 0.0
  %135 = vmatprep.subr.mxu0 0.0
  %136 = vmatpush1.msra.mxu0 0.0
  %137 = vmatprep.subr.mxu0 0.0
  %138 = vmatpush1.msra.mxu0 0.0
  %139 = vmatprep.subr.mxu0 0.0
  %140 = vmatpush1.msra.mxu0 0.0
  %141 = vmatprep.subr.mxu0 0.0
  %142 = vmatpush1.msra.mxu0 0.0
  %143 = vmatprep.subr.mxu0 0.0
  %144 = vmatpush1.msra.mxu0 0.0
  %145 = vmatprep.subr.mxu0 0.0
  %146 = vmatpush1.msra.mxu0 0.0
  %147 = vmatprep.subr.mxu0 0.0
  %148 = vmatpush1.msra.mxu0 0.0
  %149 = vmatprep.subr.mxu0 0.0
  %150 = vmatpush1.msra.mxu0 0.0
  %151 = vmatprep.subr.mxu0 0.0
  %152 = vmatpush1.msra.mxu0 0.0
  %153 = vmatprep.subr.mxu0 0.0
  %154 = vmatpush1.msra.mxu0 0.0
  %155 = vmatprep.subr.mxu0 0.0
  %156 = vmatpush1.msra.mxu0 0.0
  %157 = vmatprep.subr.mxu0 0.0
  %158 = vmatpush1.msra.mxu0 0.0
  %159 = vmatprep.subr.mxu0 0.0
  %160 = vmatpush1.msra.mxu0 0.0
  %161 = vmatprep.subr.mxu0 0.0
  %162 = vmatpush1.msra.mxu0 0.0
  %163 = vmatprep.subr.mxu0 0.0
  %164 = vmatpush1.msra.mxu0 0.0
  %165 = vmatprep.subr.mxu0 0.0
  %166 = vmatpush1.msra.mxu0 0.0
  %167 = vmatprep.subr.mxu0 0.0
  %168 = vmatpush1.msra.mxu0 0.0
  %169 = vmatprep.subr.mxu0 0.0
  %170 = vmatpush1.msra.mxu0 0.0
  %171 = vmatprep.subr.mxu0 0.0
  %172 = vmatpush1.msra.mxu0 0.0
  %173 = vmatprep.subr.mxu0 0.0
  %174 = vmatpush1.msra.mxu0 0.0
  %175 = vmatprep.subr.mxu0 0.0
  %176 = vmatpush1.msra.mxu0 0.0
  %177 = vmatprep.mubr.f32.mxu0 0.0
  %178 = vmatmul.mubr.f32.gmra.mrb[0].mxu0 %v111
  %v179 = vpop.f32.mrb[0].mxu0
  %v180 = vadd.f32 0.0, %v179
  %v181 = vpop.f32.mrb[0].mxu0
  %182 = vdwg.mxu0
  %v184 = vsel %vm36, %v22, 0
  %186 = vmatprep.subr.mxu0 0.0
  %187 = vmatpush1.msra.mxu0 %v30
  %188 = vmatprep.subr.mxu0 0.0
  %189 = vmatpush1.msra.mxu0 0.0
  %190 = vmatprep.subr.mxu0 0.0
  %191 = vmatpush1.msra.mxu0 0.0
  %192 = vmatprep.subr.mxu0 0.0
  %193 = vmatpush1.msra.mxu0 0.0
  %194 = vmatprep.subr.mxu0 0.0
  %195 = vmatpush1.msra.mxu0 0.0
  %196 = vmatprep.subr.mxu0 0.0
  %197 = vmatpush1.msra.mxu0 0.0
  %198 = vmatprep.subr.mxu0 0.0
  %199 = vmatpush1.msra.mxu0 0.0
  %200 = vmatprep.subr.mxu0 0.0
  %201 = vmatpush1.msra.mxu0 0.0
  %202 = vmatprep.subr.mxu0 0.0
  %203 = vmatpush1.msra.mxu0 0.0
  %204 = vmatprep.subr.mxu0 0.0
  %205 = vmatpush1.msra.mxu0 0.0
  %206 = vmatprep.subr.mxu0 0.0
  %207 = vmatpush1.msra.mxu0 0.0
  %208 = vmatprep.subr.mxu0 0.0
  %209 = vmatpush1.msra.mxu0 0.0
  %210 = vmatprep.subr.mxu0 0.0
  %211 = vmatpush1.msra.mxu0 0.0
  %212 = vmatprep.subr.mxu0 0.0
  %213 = vmatpush1.msra.mxu0 0.0
  %214 = vmatprep.subr.mxu0 0.0
  %215 = vmatpush1.msra.mxu0 0.0
  %216 = vmatprep.subr.mxu0 0.0
  %217 = vmatpush1.msra.mxu0 0.0
  %218 = vmatprep.subr.mxu0 0.0
  %219 = vmatpush1.msra.mxu0 0.0
  %220 = vmatprep.subr.mxu0 0.0
  %221 = vmatpush1.msra.mxu0 0.0
  %222 = vmatprep.subr.mxu0 0.0
  %223 = vmatpush1.msra.mxu0 0.0
  %224 = vmatprep.subr.mxu0 0.0
  %225 = vmatpush1.msra.mxu0 0.0
  %226 = vmatprep.subr.mxu0 0.0
  %227 = vmatpush1.msra.mxu0 0.0
  %228 = vmatprep.subr.mxu0 0.0
  %229 = vmatpush1.msra.mxu0 0.0
  %230 = vmatprep.subr.mxu0 0.0
  %231 = vmatpush1.msra.mxu0 0.0
  %232 = vmatprep.subr.mxu0 0.0
  %233 = vmatpush1.msra.mxu0 0.0
  %234 = vmatprep.subr.mxu0 0.0
  %235 = vmatpush1.msra.mxu0 0.0
  %236 = vmatprep.subr.mxu0 0.0
  %237 = vmatpush1.msra.mxu0 0.0
  %238 = vmatprep.subr.mxu0 0.0
  %239 = vmatpush1.msra.mxu0 0.0
  %240 = vmatprep.subr.mxu0 0.0
  %241 = vmatpush1.msra.mxu0 0.0
  %242 = vmatprep.subr.mxu0 0.0
  %243 = vmatpush1.msra.mxu0 0.0
  %244 = vmatprep.subr.mxu0 0.0
  %245 = vmatpush1.msra.mxu0 0.0
  %246 = vmatprep.subr.mxu0 0.0
  %247 = vmatpush1.msra.mxu0 0.0
  %248 = vmatprep.subr.mxu0 0.0
  %249 = vmatpush1.msra.mxu0 0.0
  %250 = vmatprep.mubr.f32.mxu0 0.0
  %251 = vmatmul.mubr.f32.gmra.mrb[0].mxu0 %v184
  %v252 = vpop.f32.mrb[0].mxu0
  %v253 = vadd.f32 0.0, %v252
  %v254 = vpop.f32.mrb[0].mxu0
  %255 = vdwg.mxu0
  %v257 = vsel %vm36, %v23, 0
  %259 = vmatprep.subr.mxu0 0.0
  %260 = vmatpush1.msra.mxu0 %v31
  %261 = vmatprep.subr.mxu0 0.0
  %262 = vmatpush1.msra.mxu0 0.0
  %263 = vmatprep.subr.mxu0 0.0
  %264 = vmatpush1.msra.mxu0 0.0
  %265 = vmatprep.subr.mxu0 0.0
  %266 = vmatpush1.msra.mxu0 0.0
  %267 = vmatprep.subr.mxu0 0.0
  %268 = vmatpush1.msra.mxu0 0.0
  %269 = vmatprep.subr.mxu0 0.0
  %270 = vmatpush1.msra.mxu0 0.0
  %271 = vmatprep.subr.mxu0 0.0
  %272 = vmatpush1.msra.mxu0 0.0
  %273 = vmatprep.subr.mxu0 0.0
  %274 = vmatpush1.msra.mxu0 0.0
  %275 = vmatprep.subr.mxu0 0.0
  %276 = vmatpush1.msra.mxu0 0.0
  %277 = vmatprep.subr.mxu0 0.0
  %278 = vmatpush1.msra.mxu0 0.0
  %279 = vmatprep.subr.mxu0 0.0
  %280 = vmatpush1.msra.mxu0 0.0
  %281 = vmatprep.subr.mxu0 0.0
  %282 = vmatpush1.msra.mxu0 0.0
  %283 = vmatprep.subr.mxu0 0.0
  %284 = vmatpush1.msra.mxu0 0.0
  %285 = vmatprep.subr.mxu0 0.0
  %286 = vmatpush1.msra.mxu0 0.0
  %287 = vmatprep.subr.mxu0 0.0
  %288 = vmatpush1.msra.mxu0 0.0
  %289 = vmatprep.subr.mxu0 0.0
  %290 = vmatpush1.msra.mxu0 0.0
  %291 = vmatprep.subr.mxu0 0.0
  %292 = vmatpush1.msra.mxu0 0.0
  %293 = vmatprep.subr.mxu0 0.0
  %294 = vmatpush1.msra.mxu0 0.0
  %295 = vmatprep.subr.mxu0 0.0
  %296 = vmatpush1.msra.mxu0 0.0
  %297 = vmatprep.subr.mxu0 0.0
  %298 = vmatpush1.msra.mxu0 0.0
  %299 = vmatprep.subr.mxu0 0.0
  %300 = vmatpush1.msra.mxu0 0.0
  %301 = vmatprep.subr.mxu0 0.0
  %302 = vmatpush1.msra.mxu0 0.0
  %303 = vmatprep.subr.mxu0 0.0
  %304 = vmatpush1.msra.mxu0 0.0
  %305 = vmatprep.subr.mxu0 0.0
  %306 = vmatpush1.msra.mxu0 0.0
  %307 = vmatprep.subr.mxu0 0.0
  %308 = vmatpush1.msra.mxu0 0.0
  %309 = vmatprep.subr.mxu0 0.0
  %310 = vmatpush1.msra.mxu0 0.0
  %311 = vmatprep.subr.mxu0 0.0
  %312 = vmatpush1.msra.mxu0 0.0
  %313 = vmatprep.subr.mxu0 0.0
  %314 = vmatpush1.msra.mxu0 0.0
  %315 = vmatprep.subr.mxu0 0.0
  %316 = vmatpush1.msra.mxu0 0.0
  %317 = vmatprep.subr.mxu0 0.0
  %318 = vmatpush1.msra.mxu0 0.0
  %319 = vmatprep.subr.mxu0 0.0
  %320 = vmatpush1.msra.mxu0 0.0
  %321 = vmatprep.subr.mxu0 0.0
  %322 = vmatpush1.msra.mxu0 0.0
  %323 = vmatprep.mubr.f32.mxu0 0.0
  %324 = vmatmul.mubr.f32.gmra.mrb[0].mxu0 %v257
  %v325 = vpop.f32.mrb[0].mxu0
  %v326 = vadd.f32 0.0, %v325
  %v327 = vpop.f32.mrb[0].mxu0
  %328 = vdwg.mxu0
  %v330 = vsel %vm36, %v24, 0
  %332 = vmatprep.subr.mxu0 0.0
  %333 = vmatpush1.msra.mxu0 %v32
  %334 = vmatprep.subr.mxu0 0.0
  %335 = vmatpush1.msra.mxu0 0.0
  %336 = vmatprep.subr.mxu0 0.0
  %337 = vmatpush1.msra.mxu0 0.0
  %338 = vmatprep.subr.mxu0 0.0
  %339 = vmatpush1.msra.mxu0 0.0
  %340 = vmatprep.subr.mxu0 0.0
  %341 = vmatpush1.msra.mxu0 0.0
  %342 = vmatprep.subr.mxu0 0.0
  %343 = vmatpush1.msra.mxu0 0.0
  %344 = vmatprep.subr.mxu0 0.0
  %345 = vmatpush1.msra.mxu0 0.0
  %346 = vmatprep.subr.mxu0 0.0
  %347 = vmatpush1.msra.mxu0 0.0
  %348 = vmatprep.subr.mxu0 0.0
  %349 = vmatpush1.msra.mxu0 0.0
  %350 = vmatprep.subr.mxu0 0.0
  %351 = vmatpush1.msra.mxu0 0.0
  %352 = vmatprep.subr.mxu0 0.0
  %353 = vmatpush1.msra.mxu0 0.0
  %354 = vmatprep.subr.mxu0 0.0
  %355 = vmatpush1.msra.mxu0 0.0
  %356 = vmatprep.subr.mxu0 0.0
  %357 = vmatpush1.msra.mxu0 0.0
  %358 = vmatprep.subr.mxu0 0.0
  %359 = vmatpush1.msra.mxu0 0.0
  %360 = vmatprep.subr.mxu0 0.0
  %361 = vmatpush1.msra.mxu0 0.0
  %362 = vmatprep.subr.mxu0 0.0
  %363 = vmatpush1.msra.mxu0 0.0
  %364 = vmatprep.subr.mxu0 0.0
  %365 = vmatpush1.msra.mxu0 0.0
  %366 = vmatprep.subr.mxu0 0.0
  %367 = vmatpush1.msra.mxu0 0.0
  %368 = vmatprep.subr.mxu0 0.0
  %369 = vmatpush1.msra.mxu0 0.0
  %370 = vmatprep.subr.mxu0 0.0
  %371 = vmatpush1.msra.mxu0 0.0
  %372 = vmatprep.subr.mxu0 0.0
  %373 = vmatpush1.msra.mxu0 0.0
  %374 = vmatprep.subr.mxu0 0.0
  %375 = vmatpush1.msra.mxu0 0.0
  %376 = vmatprep.subr.mxu0 0.0
  %377 = vmatpush1.msra.mxu0 0.0
  %378 = vmatprep.subr.mxu0 0.0
  %379 = vmatpush1.msra.mxu0 0.0
  %380 = vmatprep.subr.mxu0 0.0
  %381 = vmatpush1.msra.mxu0 0.0
  %382 = vmatprep.subr.mxu0 0.0
  %383 = vmatpush1.msra.mxu0 0.0
  %384 = vmatprep.subr.mxu0 0.0
  %385 = vmatpush1.msra.mxu0 0.0
  %386 = vmatprep.subr.mxu0 0.0
  %387 = vmatpush1.msra.mxu0 0.0
  %388 = vmatprep.subr.mxu0 0.0
  %389 = vmatpush1.msra.mxu0 0.0
  %390 = vmatprep.subr.mxu0 0.0
  %391 = vmatpush1.msra.mxu0 0.0
  %392 = vmatprep.subr.mxu0 0.0
  %393 = vmatpush1.msra.mxu0 0.0
  %394 = vmatprep.subr.mxu0 0.0
  %395 = vmatpush1.msra.mxu0 0.0
  %396 = vmatprep.mubr.f32.mxu0 0.0
  %397 = vmatmul.mubr.f32.gmra.mrb[0].mxu0 %v330
  %v398 = vpop.f32.mrb[0].mxu0
  %v399 = vadd.f32 0.0, %v398
  %v400 = vpop.f32.mrb[0].mxu0
  %401 = vdwg.mxu0
  %v403 = vsel %vm36, %v25, 0
  %405 = vmatprep.subr.mxu0 0.0
  %406 = vmatpush1.msra.mxu0 %v33
  %407 = vmatprep.subr.mxu0 0.0
  %408 = vmatpush1.msra.mxu0 0.0
  %409 = vmatprep.subr.mxu0 0.0
  %410 = vmatpush1.msra.mxu0 0.0
  %411 = vmatprep.subr.mxu0 0.0
  %412 = vmatpush1.msra.mxu0 0.0
  %413 = vmatprep.subr.mxu0 0.0
  %414 = vmatpush1.msra.mxu0 0.0
  %415 = vmatprep.subr.mxu0 0.0
  %416 = vmatpush1.msra.mxu0 0.0
  %417 = vmatprep.subr.mxu0 0.0
  %418 = vmatpush1.msra.mxu0 0.0
  %419 = vmatprep.subr.mxu0 0.0
  %420 = vmatpush1.msra.mxu0 0.0
  %421 = vmatprep.subr.mxu0 0.0
  %422 = vmatpush1.msra.mxu0 0.0
  %423 = vmatprep.subr.mxu0 0.0
  %424 = vmatpush1.msra.mxu0 0.0
  %425 = vmatprep.subr.mxu0 0.0
  %426 = vmatpush1.msra.mxu0 0.0
  %427 = vmatprep.subr.mxu0 0.0
  %428 = vmatpush1.msra.mxu0 0.0
  %429 = vmatprep.subr.mxu0 0.0
  %430 = vmatpush1.msra.mxu0 0.0
  %431 = vmatprep.subr.mxu0 0.0
  %432 = vmatpush1.msra.mxu0 0.0
  %433 = vmatprep.subr.mxu0 0.0
  %434 = vmatpush1.msra.mxu0 0.0
  %435 = vmatprep.subr.mxu0 0.0
  %436 = vmatpush1.msra.mxu0 0.0
  %437 = vmatprep.subr.mxu0 0.0
  %438 = vmatpush1.msra.mxu0 0.0
  %439 = vmatprep.subr.mxu0 0.0
  %440 = vmatpush1.msra.mxu0 0.0
  %441 = vmatprep.subr.mxu0 0.0
  %442 = vmatpush1.msra.mxu0 0.0
  %443 = vmatprep.subr.mxu0 0.0
  %444 = vmatpush1.msra.mxu0 0.0
  %445 = vmatprep.subr.mxu0 0.0
  %446 = vmatpush1.msra.mxu0 0.0
  %447 = vmatprep.subr.mxu0 0.0
  %448 = vmatpush1.msra.mxu0 0.0
  %449 = vmatprep.subr.mxu0 0.0
  %450 = vmatpush1.msra.mxu0 0.0
  %451 = vmatprep.subr.mxu0 0.0
  %452 = vmatpush1.msra.mxu0 0.0
  %453 = vmatprep.subr.mxu0 0.0
  %454 = vmatpush1.msra.mxu0 0.0
  %455 = vmatprep.subr.mxu0 0.0
  %456 = vmatpush1.msra.mxu0 0.0
  %457 = vmatprep.subr.mxu0 0.0
  %458 = vmatpush1.msra.mxu0 0.0
  %459 = vmatprep.subr.mxu0 0.0
  %460 = vmatpush1.msra.mxu0 0.0
  %461 = vmatprep.subr.mxu0 0.0
  %462 = vmatpush1.msra.mxu0 0.0
  %463 = vmatprep.subr.mxu0 0.0
  %464 = vmatpush1.msra.mxu0 0.0
  %465 = vmatprep.subr.mxu0 0.0
  %466 = vmatpush1.msra.mxu0 0.0
  %467 = vmatprep.subr.mxu0 0.0
  %468 = vmatpush1.msra.mxu0 0.0
  %469 = vmatprep.mubr.f32.mxu0 0.0
  %470 = vmatmul.mubr.f32.gmra.mrb[0].mxu0 %v403
  %v471 = vpop.f32.mrb[0].mxu0
  %v472 = vadd.f32 0.0, %v471
  %v473 = vpop.f32.mrb[0].mxu0
  %474 = vdwg.mxu0
  %v476 = vsel %vm36, %v26, 0
  %478 = vmatprep.subr.mxu0 0.0
  %479 = vmatpush1.msra.mxu0 %v34
  %480 = vmatprep.subr.mxu0 0.0
  %481 = vmatpush1.msra.mxu0 0.0
  %482 = vmatprep.subr.mxu0 0.0
  %483 = vmatpush1.msra.mxu0 0.0
  %484 = vmatprep.subr.mxu0 0.0
  %485 = vmatpush1.msra.mxu0 0.0
  %486 = vmatprep.subr.mxu0 0.0
  %487 = vmatpush1.msra.mxu0 0.0
  %488 = vmatprep.subr.mxu0 0.0
  %489 = vmatpush1.msra.mxu0 0.0
  %490 = vmatprep.subr.mxu0 0.0
  %491 = vmatpush1.msra.mxu0 0.0
  %492 = vmatprep.subr.mxu0 0.0
  %493 = vmatpush1.msra.mxu0 0.0
  %494 = vmatprep.subr.mxu0 0.0
  %495 = vmatpush1.msra.mxu0 0.0
  %496 = vmatprep.subr.mxu0 0.0
  %497 = vmatpush1.msra.mxu0 0.0
  %498 = vmatprep.subr.mxu0 0.0
  %499 = vmatpush1.msra.mxu0 0.0
  %500 = vmatprep.subr.mxu0 0.0
  %501 = vmatpush1.msra.mxu0 0.0
  %502 = vmatprep.subr.mxu0 0.0
  %503 = vmatpush1.msra.mxu0 0.0
  %504 = vmatprep.subr.mxu0 0.0
  %505 = vmatpush1.msra.mxu0 0.0
  %506 = vmatprep.subr.mxu0 0.0
  %507 = vmatpush1.msra.mxu0 0.0
  %508 = vmatprep.subr.mxu0 0.0
  %509 = vmatpush1.msra.mxu0 0.0
  %510 = vmatprep.subr.mxu0 0.0
  %511 = vmatpush1.msra.mxu0 0.0
  %512 = vmatprep.subr.mxu0 0.0
  %513 = vmatpush1.msra.mxu0 0.0
  %514 = vmatprep.subr.mxu0 0.0
  %515 = vmatpush1.msra.mxu0 0.0
  %516 = vmatprep.subr.mxu0 0.0
  %517 = vmatpush1.msra.mxu0 0.0
  %518 = vmatprep.subr.mxu0 0.0
  %519 = vmatpush1.msra.mxu0 0.0
  %520 = vmatprep.subr.mxu0 0.0
  %521 = vmatpush1.msra.mxu0 0.0
  %522 = vmatprep.subr.mxu0 0.0
  %523 = vmatpush1.msra.mxu0 0.0
  %524 = vmatprep.subr.mxu0 0.0
  %525 = vmatpush1.msra.mxu0 0.0
  %526 = vmatprep.subr.mxu0 0.0
  %527 = vmatpush1.msra.mxu0 0.0
  %528 = vmatprep.subr.mxu0 0.0
  %529 = vmatpush1.msra.mxu0 0.0
  %530 = vmatprep.subr.mxu0 0.0
  %531 = vmatpush1.msra.mxu0 0.0
  %532 = vmatprep.subr.mxu0 0.0
  %533 = vmatpush1.msra.mxu0 0.0
  %534 = vmatprep.subr.mxu0 0.0
  %535 = vmatpush1.msra.mxu0 0.0
  %536 = vmatprep.subr.mxu0 0.0
  %537 = vmatpush1.msra.mxu0 0.0
  %538 = vmatprep.subr.mxu0 0.0
  %539 = vmatpush1.msra.mxu0 0.0
  %540 = vmatprep.subr.mxu0 0.0
  %541 = vmatpush1.msra.mxu0 0.0
  %542 = vmatprep.mubr.f32.mxu0 0.0
  %543 = vmatmul.mubr.f32.gmra.mrb[0].mxu0 %v476
  %v544 = vpop.f32.mrb[0].mxu0
  %v545 = vadd.f32 0.0, %v544
  %v546 = vpop.f32.mrb[0].mxu0
  %547 = vdwg.mxu0
  %v549 = vsel %vm36, %v27, 0
  %551 = vmatprep.subr.mxu0 0.0
  %552 = vmatpush1.msra.mxu0 %v35
  %553 = vmatprep.subr.mxu0 0.0
  %554 = vmatpush1.msra.mxu0 0.0
  %555 = vmatprep.subr.mxu0 0.0
  %556 = vmatpush1.msra.mxu0 0.0
  %557 = vmatprep.subr.mxu0 0.0
  %558 = vmatpush1.msra.mxu0 0.0
  %559 = vmatprep.subr.mxu0 0.0
  %560 = vmatpush1.msra.mxu0 0.0
  %561 = vmatprep.subr.mxu0 0.0
  %562 = vmatpush1.msra.mxu0 0.0
  %563 = vmatprep.subr.mxu0 0.0
  %564 = vmatpush1.msra.mxu0 0.0
  %565 = vmatprep.subr.mxu0 0.0
  %566 = vmatpush1.msra.mxu0 0.0
  %567 = vmatprep.subr.mxu0 0.0
  %568 = vmatpush1.msra.mxu0 0.0
  %569 = vmatprep.subr.mxu0 0.0
  %570 = vmatpush1.msra.mxu0 0.0
  %571 = vmatprep.subr.mxu0 0.0
  %572 = vmatpush1.msra.mxu0 0.0
  %573 = vmatprep.subr.mxu0 0.0
  %574 = vmatpush1.msra.mxu0 0.0
  %575 = vmatprep.subr.mxu0 0.0
  %576 = vmatpush1.msra.mxu0 0.0
  %577 = vmatprep.subr.mxu0 0.0
  %578 = vmatpush1.msra.mxu0 0.0
  %579 = vmatprep.subr.mxu0 0.0
  %580 = vmatpush1.msra.mxu0 0.0
  %581 = vmatprep.subr.mxu0 0.0
  %582 = vmatpush1.msra.mxu0 0.0
  %583 = vmatprep.subr.mxu0 0.0
  %584 = vmatpush1.msra.mxu0 0.0
  %585 = vmatprep.subr.mxu0 0.0
  %586 = vmatpush1.msra.mxu0 0.0
  %587 = vmatprep.subr.mxu0 0.0
  %588 = vmatpush1.msra.mxu0 0.0
  %589 = vmatprep.subr.mxu0 0.0
  %590 = vmatpush1.msra.mxu0 0.0
  %591 = vmatprep.subr.mxu0 0.0
  %592 = vmatpush1.msra.mxu0 0.0
  %593 = vmatprep.subr.mxu0 0.0
  %594 = vmatpush1.msra.mxu0 0.0
  %595 = vmatprep.subr.mxu0 0.0
  %596 = vmatpush1.msra.mxu0 0.0
  %597 = vmatprep.subr.mxu0 0.0
  %598 = vmatpush1.msra.mxu0 0.0
  %599 = vmatprep.subr.mxu0 0.0
  %600 = vmatpush1.msra.mxu0 0.0
  %601 = vmatprep.subr.mxu0 0.0
  %602 = vmatpush1.msra.mxu0 0.0
  %603 = vmatprep.subr.mxu0 0.0
  %604 = vmatpush1.msra.mxu0 0.0
  %605 = vmatprep.subr.mxu0 0.0
  %606 = vmatpush1.msra.mxu0 0.0
  %607 = vmatprep.subr.mxu0 0.0
  %608 = vmatpush1.msra.mxu0 0.0
  %609 = vmatprep.subr.mxu0 0.0
  %610 = vmatpush1.msra.mxu0 0.0
  %611 = vmatprep.subr.mxu0 0.0
  %612 = vmatpush1.msra.mxu0 0.0
  %613 = vmatprep.subr.mxu0 0.0
  %614 = vmatpush1.msra.mxu0 0.0
  %615 = vmatprep.mubr.f32.mxu0 0.0
  %616 = vmatmul.mubr.f32.gmra.mrb[0].mxu0 %v549
  %v617 = vpop.f32.mrb[0].mxu0
  %v618 = vadd.f32 0.0, %v617
  %v619 = vpop.f32.mrb[0].mxu0
  %620 = vdwg.mxu0
  %v621 = vld [vmem:[%s3] sm:$0xff]
  %v622 = vmul.f32 %v107, %v621
  %v623 = vmul.f32 %v180, %v621
  %v624 = vmul.f32 %v253, %v621
  %v625 = vmul.f32 %v326, %v621
  %v626 = vmul.f32 %v399, %v621
  %v627 = vmul.f32 %v472, %v621
  %v628 = vmul.f32 %v545, %v621
  %v629 = vmul.f32 %v618, %v621
  %v630 = vsel %vm36, %v622, -inf
  %631 = vmax.xlane.f32.xlu0 %v630
  %v632 = vpop.xlane.xlu0 %631
  %v633 = vsel %vm36, %v623, -inf
  %634 = vmax.xlane.f32.xlu0 %v633
  %v635 = vpop.xlane.xlu0 %634
  %v636 = vsel %vm36, %v624, -inf
  %637 = vmax.xlane.f32.xlu0 %v636
  %v638 = vpop.xlane.xlu0 %637
  %v639 = vsel %vm36, %v625, -inf
  %640 = vmax.xlane.f32.xlu0 %v639
  %v641 = vpop.xlane.xlu0 %640
  %v642 = vsel %vm36, %v626, -inf
  %643 = vmax.xlane.f32.xlu0 %v642
  %v644 = vpop.xlane.xlu0 %643
  %v645 = vsel %vm36, %v627, -inf
  %646 = vmax.xlane.f32.xlu0 %v645
  %v647 = vpop.xlane.xlu0 %646
  %v648 = vsel %vm36, %v628, -inf
  %649 = vmax.xlane.f32.xlu0 %v648
  %v650 = vpop.xlane.xlu0 %649
  %v651 = vsel %vm36, %v629, -inf
  %652 = vmax.xlane.f32.xlu0 %v651
  %v653 = vpop.xlane.xlu0 %652
  %v654 = vsub.f32 %v622, %v632
  %v655 = vsub.f32 %v623, %v635
  %v656 = vsub.f32 %v624, %v638
  %v657 = vsub.f32 %v625, %v641
  %v658 = vsub.f32 %v626, %v644
  %v659 = vsub.f32 %v627, %v647
  %v660 = vsub.f32 %v628, %v650
  %v661 = vsub.f32 %v629, %v653
  %v662 = vmul.f32 %v654, 1.442695
  %v663 = vpow.pop %v662
  %v664 = vmul.f32 %v655, 1.442695
  %v665 = vpow.pop %v664
  %v666 = vmul.f32 %v656, 1.442695
  %v667 = vpow.pop %v666
  %v668 = vmul.f32 %v657, 1.442695
  %v669 = vpow.pop %v668
  %v670 = vmul.f32 %v658, 1.442695
  %v671 = vpow.pop %v670
  %v672 = vmul.f32 %v659, 1.442695
  %v673 = vpow.pop %v672
  %v674 = vmul.f32 %v660, 1.442695
  %v675 = vpow.pop %v674
  %v676 = vmul.f32 %v661, 1.442695
  %v677 = vpow.pop %v676
  %v678 = vsel %vm36, %v663, 0.0
  %679 = vadd.xlane.f32.xlu0 %v678
  %v680 = vpop.xlane.xlu0 %679
  %v681 = vsel %vm36, %v665, 0.0
  %682 = vadd.xlane.f32.xlu0 %v681
  %v683 = vpop.xlane.xlu0 %682
  %v684 = vsel %vm36, %v667, 0.0
  %685 = vadd.xlane.f32.xlu0 %v684
  %v686 = vpop.xlane.xlu0 %685
  %v687 = vsel %vm36, %v669, 0.0
  %688 = vadd.xlane.f32.xlu0 %v687
  %v689 = vpop.xlane.xlu0 %688
  %v690 = vsel %vm36, %v671, 0.0
  %691 = vadd.xlane.f32.xlu0 %v690
  %v692 = vpop.xlane.xlu0 %691
  %v693 = vsel %vm36, %v673, 0.0
  %694 = vadd.xlane.f32.xlu0 %v693
  %v695 = vpop.xlane.xlu0 %694
  %v696 = vsel %vm36, %v675, 0.0
  %697 = vadd.xlane.f32.xlu0 %v696
  %v698 = vpop.xlane.xlu0 %697
  %v699 = vsel %vm36, %v677, 0.0
  %700 = vadd.xlane.f32.xlu0 %v699
  %v701 = vpop.xlane.xlu0 %700
  %v702 = vrcp.pop %v680
  %v703 = vmul.f32 %v663, %v702
  %v704 = vrcp.pop %v683
  %v705 = vmul.f32 %v665, %v704
  %v706 = vrcp.pop %v686
  %v707 = vmul.f32 %v667, %v706
  %v708 = vrcp.pop %v689
  %v709 = vmul.f32 %v669, %v708
  %v710 = vrcp.pop %v692
  %v711 = vmul.f32 %v671, %v710
  %v712 = vrcp.pop %v695
  %v713 = vmul.f32 %v673, %v712
  %v714 = vrcp.pop %v698
  %v715 = vmul.f32 %v675, %v714
  %v716 = vrcp.pop %v701
  %v717 = vmul.f32 %v677, %v716
  %v718 = vld [vmem:[%s4] sm:$0xff]
  %v719 = vld [vmem:[%s4 + $0x8] sm:$0xff]
  %v720 = vld [vmem:[%s4 + $0x10] sm:$0xff]
  %v721 = vld [vmem:[%s4 + $0x18] sm:$0xff]
  %v722 = vld [vmem:[%s4 + $0x20] sm:$0xff]
  %v723 = vld [vmem:[%s4 + $0x28] sm:$0xff]
  %v724 = vld [vmem:[%s4 + $0x30] sm:$0xff]
  %v725 = vld [vmem:[%s4 + $0x38] sm:$0xff]
  %v726 = vmul.f32 %v703, %v718
  %v727 = vmul.f32 %v705, %v719
  %v728 = vmul.f32 %v707, %v720
  %v729 = vmul.f32 %v709, %v721
  %v730 = vmul.f32 %v711, %v722
  %v731 = vmul.f32 %v713, %v723
  %v732 = vmul.f32 %v715, %v724
  %v733 = vmul.f32 %v717, %v725
  %v734 = vld [vmem:[%s2] sm:$0xff]
  %v735 = vld [vmem:[%s2 + $0x8] sm:$0xff]
  %v736 = vld [vmem:[%s2 + $0x10] sm:$0xff]
  %v737 = vld [vmem:[%s2 + $0x18] sm:$0xff]
  %v738 = vld [vmem:[%s2 + $0x20] sm:$0xff]
  %v739 = vld [vmem:[%s2 + $0x28] sm:$0xff]
  %v740 = vld [vmem:[%s2 + $0x30] sm:$0xff]
  %v741 = vld [vmem:[%s2 + $0x38] sm:$0xff]
  %v743 = vsel %vm36, %v726, 0
  %745 = vmatprep.subr.mxu0 0.0
  %746 = vmatpush1.msra.mxu0 %v734
  %747 = vmatprep.subr.mxu0 0.0
  %748 = vmatpush1.msra.mxu0 0.0
  %749 = vmatprep.subr.mxu0 0.0
  %750 = vmatpush1.msra.mxu0 0.0
  %751 = vmatprep.subr.mxu0 0.0
  %752 = vmatpush1.msra.mxu0 0.0
  %753 = vmatprep.subr.mxu0 0.0
  %754 = vmatpush1.msra.mxu0 0.0
  %755 = vmatprep.subr.mxu0 0.0
  %756 = vmatpush1.msra.mxu0 0.0
  %757 = vmatprep.subr.mxu0 0.0
  %758 = vmatpush1.msra.mxu0 0.0
  %759 = vmatprep.subr.mxu0 0.0
  %760 = vmatpush1.msra.mxu0 0.0
  %761 = vmatprep.subr.mxu0 0.0
  %762 = vmatpush1.msra.mxu0 0.0
  %763 = vmatprep.subr.mxu0 0.0
  %764 = vmatpush1.msra.mxu0 0.0
  %765 = vmatprep.subr.mxu0 0.0
  %766 = vmatpush1.msra.mxu0 0.0
  %767 = vmatprep.subr.mxu0 0.0
  %768 = vmatpush1.msra.mxu0 0.0
  %769 = vmatprep.subr.mxu0 0.0
  %770 = vmatpush1.msra.mxu0 0.0
  %771 = vmatprep.subr.mxu0 0.0
  %772 = vmatpush1.msra.mxu0 0.0
  %773 = vmatprep.subr.mxu0 0.0
  %774 = vmatpush1.msra.mxu0 0.0
  %775 = vmatprep.subr.mxu0 0.0
  %776 = vmatpush1.msra.mxu0 0.0
  %777 = vmatprep.subr.mxu0 0.0
  %778 = vmatpush1.msra.mxu0 0.0
  %779 = vmatprep.subr.mxu0 0.0
  %780 = vmatpush1.msra.mxu0 0.0
  %781 = vmatprep.subr.mxu0 0.0
  %782 = vmatpush1.msra.mxu0 0.0
  %783 = vmatprep.subr.mxu0 0.0
  %784 = vmatpush1.msra.mxu0 0.0
  %785 = vmatprep.subr.mxu0 0.0
  %786 = vmatpush1.msra.mxu0 0.0
  %787 = vmatprep.subr.mxu0 0.0
  %788 = vmatpush1.msra.mxu0 0.0
  %789 = vmatprep.subr.mxu0 0.0
  %790 = vmatpush1.msra.mxu0 0.0
  %791 = vmatprep.subr.mxu0 0.0
  %792 = vmatpush1.msra.mxu0 0.0
  %793 = vmatprep.subr.mxu0 0.0
  %794 = vmatpush1.msra.mxu0 0.0
  %795 = vmatprep.subr.mxu0 0.0
  %796 = vmatpush1.msra.mxu0 0.0
  %797 = vmatprep.subr.mxu0 0.0
  %798 = vmatpush1.msra.mxu0 0.0
  %799 = vmatprep.subr.mxu0 0.0
  %800 = vmatpush1.msra.mxu0 0.0
  %801 = vmatprep.subr.mxu0 0.0
  %802 = vmatpush1.msra.mxu0 0.0
  %803 = vmatprep.subr.mxu0 0.0
  %804 = vmatpush1.msra.mxu0 0.0
  %805 = vmatprep.subr.mxu0 0.0
  %806 = vmatpush1.msra.mxu0 0.0
  %807 = vmatprep.subr.mxu0 0.0
  %808 = vmatpush1.msra.mxu0 0.0
  %809 = vmatprep.mubr.f32.mxu0 0.0
  %810 = vmatmul.mubr.f32.gmra.mrb[0].mxu0 %v743
  %v811 = vpop.f32.mrb[0].mxu0
  %v812 = vadd.f32 0.0, %v811
  %v813 = vpop.f32.mrb[0].mxu0
  %814 = vdwg.mxu0
  %v816 = vsel %vm36, %v727, 0
  %818 = vmatprep.subr.mxu0 0.0
  %819 = vmatpush1.msra.mxu0 %v735
  %820 = vmatprep.subr.mxu0 0.0
  %821 = vmatpush1.msra.mxu0 0.0
  %822 = vmatprep.subr.mxu0 0.0
  %823 = vmatpush1.msra.mxu0 0.0
  %824 = vmatprep.subr.mxu0 0.0
  %825 = vmatpush1.msra.mxu0 0.0
  %826 = vmatprep.subr.mxu0 0.0
  %827 = vmatpush1.msra.mxu0 0.0
  %828 = vmatprep.subr.mxu0 0.0
  %829 = vmatpush1.msra.mxu0 0.0
  %830 = vmatprep.subr.mxu0 0.0
  %831 = vmatpush1.msra.mxu0 0.0
  %832 = vmatprep.subr.mxu0 0.0
  %833 = vmatpush1.msra.mxu0 0.0
  %834 = vmatprep.subr.mxu0 0.0
  %835 = vmatpush1.msra.mxu0 0.0
  %836 = vmatprep.subr.mxu0 0.0
  %837 = vmatpush1.msra.mxu0 0.0
  %838 = vmatprep.subr.mxu0 0.0
  %839 = vmatpush1.msra.mxu0 0.0
  %840 = vmatprep.subr.mxu0 0.0
  %841 = vmatpush1.msra.mxu0 0.0
  %842 = vmatprep.subr.mxu0 0.0
  %843 = vmatpush1.msra.mxu0 0.0
  %844 = vmatprep.subr.mxu0 0.0
  %845 = vmatpush1.msra.mxu0 0.0
  %846 = vmatprep.subr.mxu0 0.0
  %847 = vmatpush1.msra.mxu0 0.0
  %848 = vmatprep.subr.mxu0 0.0
  %849 = vmatpush1.msra.mxu0 0.0
  %850 = vmatprep.subr.mxu0 0.0
  %851 = vmatpush1.msra.mxu0 0.0
  %852 = vmatprep.subr.mxu0 0.0
  %853 = vmatpush1.msra.mxu0 0.0
  %854 = vmatprep.subr.mxu0 0.0
  %855 = vmatpush1.msra.mxu0 0.0
  %856 = vmatprep.subr.mxu0 0.0
  %857 = vmatpush1.msra.mxu0 0.0
  %858 = vmatprep.subr.mxu0 0.0
  %859 = vmatpush1.msra.mxu0 0.0
  %860 = vmatprep.subr.mxu0 0.0
  %861 = vmatpush1.msra.mxu0 0.0
  %862 = vmatprep.subr.mxu0 0.0
  %863 = vmatpush1.msra.mxu0 0.0
  %864 = vmatprep.subr.mxu0 0.0
  %865 = vmatpush1.msra.mxu0 0.0
  %866 = vmatprep.subr.mxu0 0.0
  %867 = vmatpush1.msra.mxu0 0.0
  %868 = vmatprep.subr.mxu0 0.0
  %869 = vmatpush1.msra.mxu0 0.0
  %870 = vmatprep.subr.mxu0 0.0
  %871 = vmatpush1.msra.mxu0 0.0
  %872 = vmatprep.subr.mxu0 0.0
  %873 = vmatpush1.msra.mxu0 0.0
  %874 = vmatprep.subr.mxu0 0.0
  %875 = vmatpush1.msra.mxu0 0.0
  %876 = vmatprep.subr.mxu0 0.0
  %877 = vmatpush1.msra.mxu0 0.0
  %878 = vmatprep.subr.mxu0 0.0
  %879 = vmatpush1.msra.mxu0 0.0
  %880 = vmatprep.subr.mxu0 0.0
  %881 = vmatpush1.msra.mxu0 0.0
  %882 = vmatprep.mubr.f32.mxu0 0.0
  %883 = vmatmul.mubr.f32.gmra.mrb[0].mxu0 %v816
  %v884 = vpop.f32.mrb[0].mxu0
  %v885 = vadd.f32 0.0, %v884
  %v886 = vpop.f32.mrb[0].mxu0
  %887 = vdwg.mxu0
  %v889 = vsel %vm36, %v728, 0
  %891 = vmatprep.subr.mxu0 0.0
  %892 = vmatpush1.msra.mxu0 %v736
  %893 = vmatprep.subr.mxu0 0.0
  %894 = vmatpush1.msra.mxu0 0.0
  %895 = vmatprep.subr.mxu0 0.0
  %896 = vmatpush1.msra.mxu0 0.0
  %897 = vmatprep.subr.mxu0 0.0
  %898 = vmatpush1.msra.mxu0 0.0
  %899 = vmatprep.subr.mxu0 0.0
  %900 = vmatpush1.msra.mxu0 0.0
  %901 = vmatprep.subr.mxu0 0.0
  %902 = vmatpush1.msra.mxu0 0.0
  %903 = vmatprep.subr.mxu0 0.0
  %904 = vmatpush1.msra.mxu0 0.0
  %905 = vmatprep.subr.mxu0 0.0
  %906 = vmatpush1.msra.mxu0 0.0
  %907 = vmatprep.subr.mxu0 0.0
  %908 = vmatpush1.msra.mxu0 0.0
  %909 = vmatprep.subr.mxu0 0.0
  %910 = vmatpush1.msra.mxu0 0.0
  %911 = vmatprep.subr.mxu0 0.0
  %912 = vmatpush1.msra.mxu0 0.0
  %913 = vmatprep.subr.mxu0 0.0
  %914 = vmatpush1.msra.mxu0 0.0
  %915 = vmatprep.subr.mxu0 0.0
  %916 = vmatpush1.msra.mxu0 0.0
  %917 = vmatprep.subr.mxu0 0.0
  %918 = vmatpush1.msra.mxu0 0.0
  %919 = vmatprep.subr.mxu0 0.0
  %920 = vmatpush1.msra.mxu0 0.0
  %921 = vmatprep.subr.mxu0 0.0
  %922 = vmatpush1.msra.mxu0 0.0
  %923 = vmatprep.subr.mxu0 0.0
  %924 = vmatpush1.msra.mxu0 0.0
  %925 = vmatprep.subr.mxu0 0.0
  %926 = vmatpush1.msra.mxu0 0.0
  %927 = vmatprep.subr.mxu0 0.0
  %928 = vmatpush1.msra.mxu0 0.0
  %929 = vmatprep.subr.mxu0 0.0
  %930 = vmatpush1.msra.mxu0 0.0
  %931 = vmatprep.subr.mxu0 0.0
  %932 = vmatpush1.msra.mxu0 0.0
  %933 = vmatprep.subr.mxu0 0.0
  %934 = vmatpush1.msra.mxu0 0.0
  %935 = vmatprep.subr.mxu0 0.0
  %936 = vmatpush1.msra.mxu0 0.0
  %937 = vmatprep.subr.mxu0 0.0
  %938 = vmatpush1.msra.mxu0 0.0
  %939 = vmatprep.subr.mxu0 0.0
  %940 = vmatpush1.msra.mxu0 0.0
  %941 = vmatprep.subr.mxu0 0.0
  %942 = vmatpush1.msra.mxu0 0.0
  %943 = vmatprep.subr.mxu0 0.0
  %944 = vmatpush1.msra.mxu0 0.0
  %945 = vmatprep.subr.mxu0 0.0
  %946 = vmatpush1.msra.mxu0 0.0
  %947 = vmatprep.subr.mxu0 0.0
  %948 = vmatpush1.msra.mxu0 0.0
  %949 = vmatprep.subr.mxu0 0.0
  %950 = vmatpush1.msra.mxu0 0.0
  %951 = vmatprep.subr.mxu0 0.0
  %952 = vmatpush1.msra.mxu0 0.0
  %953 = vmatprep.subr.mxu0 0.0
  %954 = vmatpush1.msra.mxu0 0.0
  %955 = vmatprep.mubr.f32.mxu0 0.0
  %956 = vmatmul.mubr.f32.gmra.mrb[0].mxu0 %v889
  %v957 = vpop.f32.mrb[0].mxu0
  %v958 = vadd.f32 0.0, %v957
  %v959 = vpop.f32.mrb[0].mxu0
  %960 = vdwg.mxu0
  %v962 = vsel %vm36, %v729, 0
  %964 = vmatprep.subr.mxu0 0.0
  %965 = vmatpush1.msra.mxu0 %v737
  %966 = vmatprep.subr.mxu0 0.0
  %967 = vmatpush1.msra.mxu0 0.0
  %968 = vmatprep.subr.mxu0 0.0
  %969 = vmatpush1.msra.mxu0 0.0
  %970 = vmatprep.subr.mxu0 0.0
  %971 = vmatpush1.msra.mxu0 0.0
  %972 = vmatprep.subr.mxu0 0.0
  %973 = vmatpush1.msra.mxu0 0.0
  %974 = vmatprep.subr.mxu0 0.0
  %975 = vmatpush1.msra.mxu0 0.0
  %976 = vmatprep.subr.mxu0 0.0
  %977 = vmatpush1.msra.mxu0 0.0
  %978 = vmatprep.subr.mxu0 0.0
  %979 = vmatpush1.msra.mxu0 0.0
  %980 = vmatprep.subr.mxu0 0.0
  %981 = vmatpush1.msra.mxu0 0.0
  %982 = vmatprep.subr.mxu0 0.0
  %983 = vmatpush1.msra.mxu0 0.0
  %984 = vmatprep.subr.mxu0 0.0
  %985 = vmatpush1.msra.mxu0 0.0
  %986 = vmatprep.subr.mxu0 0.0
  %987 = vmatpush1.msra.mxu0 0.0
  %988 = vmatprep.subr.mxu0 0.0
  %989 = vmatpush1.msra.mxu0 0.0
  %990 = vmatprep.subr.mxu0 0.0
  %991 = vmatpush1.msra.mxu0 0.0
  %992 = vmatprep.subr.mxu0 0.0
  %993 = vmatpush1.msra.mxu0 0.0
  %994 = vmatprep.subr.mxu0 0.0
  %995 = vmatpush1.msra.mxu0 0.0
  %996 = vmatprep.subr.mxu0 0.0
  %997 = vmatpush1.msra.mxu0 0.0
  %998 = vmatprep.subr.mxu0 0.0
  %999 = vmatpush1.msra.mxu0 0.0
  %1000 = vmatprep.subr.mxu0 0.0
  %1001 = vmatpush1.msra.mxu0 0.0
  %1002 = vmatprep.subr.mxu0 0.0
  %1003 = vmatpush1.msra.mxu0 0.0
  %1004 = vmatprep.subr.mxu0 0.0
  %1005 = vmatpush1.msra.mxu0 0.0
  %1006 = vmatprep.subr.mxu0 0.0
  %1007 = vmatpush1.msra.mxu0 0.0
  %1008 = vmatprep.subr.mxu0 0.0
  %1009 = vmatpush1.msra.mxu0 0.0
  %1010 = vmatprep.subr.mxu0 0.0
  %1011 = vmatpush1.msra.mxu0 0.0
  %1012 = vmatprep.subr.mxu0 0.0
  %1013 = vmatpush1.msra.mxu0 0.0
  %1014 = vmatprep.subr.mxu0 0.0
  %1015 = vmatpush1.msra.mxu0 0.0
  %1016 = vmatprep.subr.mxu0 0.0
  %1017 = vmatpush1.msra.mxu0 0.0
  %1018 = vmatprep.subr.mxu0 0.0
  %1019 = vmatpush1.msra.mxu0 0.0
  %1020 = vmatprep.subr.mxu0 0.0
  %1021 = vmatpush1.msra.mxu0 0.0
  %1022 = vmatprep.subr.mxu0 0.0
  %1023 = vmatpush1.msra.mxu0 0.0
  %1024 = vmatprep.subr.mxu0 0.0
  %1025 = vmatpush1.msra.mxu0 0.0
  %1026 = vmatprep.subr.mxu0 0.0
  %1027 = vmatpush1.msra.mxu0 0.0
  %1028 = vmatprep.mubr.f32.mxu0 0.0
  %1029 = vmatmul.mubr.f32.gmra.mrb[0].mxu0 %v962
  %v1030 = vpop.f32.mrb[0].mxu0
  %v1031 = vadd.f32 0.0, %v1030
  %v1032 = vpop.f32.mrb[0].mxu0
  %1033 = vdwg.mxu0
  %v1035 = vsel %vm36, %v730, 0
  %1037 = vmatprep.subr.mxu0 0.0
  %1038 = vmatpush1.msra.mxu0 %v738
  %1039 = vmatprep.subr.mxu0 0.0
  %1040 = vmatpush1.msra.mxu0 0.0
  %1041 = vmatprep.subr.mxu0 0.0
  %1042 = vmatpush1.msra.mxu0 0.0
  %1043 = vmatprep.subr.mxu0 0.0
  %1044 = vmatpush1.msra.mxu0 0.0
  %1045 = vmatprep.subr.mxu0 0.0
  %1046 = vmatpush1.msra.mxu0 0.0
  %1047 = vmatprep.subr.mxu0 0.0
  %1048 = vmatpush1.msra.mxu0 0.0
  %1049 = vmatprep.subr.mxu0 0.0
  %1050 = vmatpush1.msra.mxu0 0.0
  %1051 = vmatprep.subr.mxu0 0.0
  %1052 = vmatpush1.msra.mxu0 0.0
  %1053 = vmatprep.subr.mxu0 0.0
  %1054 = vmatpush1.msra.mxu0 0.0
  %1055 = vmatprep.subr.mxu0 0.0
  %1056 = vmatpush1.msra.mxu0 0.0
  %1057 = vmatprep.subr.mxu0 0.0
  %1058 = vmatpush1.msra.mxu0 0.0
  %1059 = vmatprep.subr.mxu0 0.0
  %1060 = vmatpush1.msra.mxu0 0.0
  %1061 = vmatprep.subr.mxu0 0.0
  %1062 = vmatpush1.msra.mxu0 0.0
  %1063 = vmatprep.subr.mxu0 0.0
  %1064 = vmatpush1.msra.mxu0 0.0
  %1065 = vmatprep.subr.mxu0 0.0
  %1066 = vmatpush1.msra.mxu0 0.0
  %1067 = vmatprep.subr.mxu0 0.0
  %1068 = vmatpush1.msra.mxu0 0.0
  %1069 = vmatprep.subr.mxu0 0.0
  %1070 = vmatpush1.msra.mxu0 0.0
  %1071 = vmatprep.subr.mxu0 0.0
  %1072 = vmatpush1.msra.mxu0 0.0
  %1073 = vmatprep.subr.mxu0 0.0
  %1074 = vmatpush1.msra.mxu0 0.0
  %1075 = vmatprep.subr.mxu0 0.0
  %1076 = vmatpush1.msra.mxu0 0.0
  %1077 = vmatprep.subr.mxu0 0.0
  %1078 = vmatpush1.msra.mxu0 0.0
  %1079 = vmatprep.subr.mxu0 0.0
  %1080 = vmatpush1.msra.mxu0 0.0
  %1081 = vmatprep.subr.mxu0 0.0
  %1082 = vmatpush1.msra.mxu0 0.0
  %1083 = vmatprep.subr.mxu0 0.0
  %1084 = vmatpush1.msra.mxu0 0.0
  %1085 = vmatprep.subr.mxu0 0.0
  %1086 = vmatpush1.msra.mxu0 0.0
  %1087 = vmatprep.subr.mxu0 0.0
  %1088 = vmatpush1.msra.mxu0 0.0
  %1089 = vmatprep.subr.mxu0 0.0
  %1090 = vmatpush1.msra.mxu0 0.0
  %1091 = vmatprep.subr.mxu0 0.0
  %1092 = vmatpush1.msra.mxu0 0.0
  %1093 = vmatprep.subr.mxu0 0.0
  %1094 = vmatpush1.msra.mxu0 0.0
  %1095 = vmatprep.subr.mxu0 0.0
  %1096 = vmatpush1.msra.mxu0 0.0
  %1097 = vmatprep.subr.mxu0 0.0
  %1098 = vmatpush1.msra.mxu0 0.0
  %1099 = vmatprep.subr.mxu0 0.0
  %1100 = vmatpush1.msra.mxu0 0.0
  %1101 = vmatprep.mubr.f32.mxu0 0.0
  %1102 = vmatmul.mubr.f32.gmra.mrb[0].mxu0 %v1035
  %v1103 = vpop.f32.mrb[0].mxu0
  %v1104 = vadd.f32 0.0, %v1103
  %v1105 = vpop.f32.mrb[0].mxu0
  %1106 = vdwg.mxu0
  %v1108 = vsel %vm36, %v731, 0
  %1110 = vmatprep.subr.mxu0 0.0
  %1111 = vmatpush1.msra.mxu0 %v739
  %1112 = vmatprep.subr.mxu0 0.0
  %1113 = vmatpush1.msra.mxu0 0.0
  %1114 = vmatprep.subr.mxu0 0.0
  %1115 = vmatpush1.msra.mxu0 0.0
  %1116 = vmatprep.subr.mxu0 0.0
  %1117 = vmatpush1.msra.mxu0 0.0
  %1118 = vmatprep.subr.mxu0 0.0
  %1119 = vmatpush1.msra.mxu0 0.0
  %1120 = vmatprep.subr.mxu0 0.0
  %1121 = vmatpush1.msra.mxu0 0.0
  %1122 = vmatprep.subr.mxu0 0.0
  %1123 = vmatpush1.msra.mxu0 0.0
  %1124 = vmatprep.subr.mxu0 0.0
  %1125 = vmatpush1.msra.mxu0 0.0
  %1126 = vmatprep.subr.mxu0 0.0
  %1127 = vmatpush1.msra.mxu0 0.0
  %1128 = vmatprep.subr.mxu0 0.0
  %1129 = vmatpush1.msra.mxu0 0.0
  %1130 = vmatprep.subr.mxu0 0.0
  %1131 = vmatpush1.msra.mxu0 0.0
  %1132 = vmatprep.subr.mxu0 0.0
  %1133 = vmatpush1.msra.mxu0 0.0
  %1134 = vmatprep.subr.mxu0 0.0
  %1135 = vmatpush1.msra.mxu0 0.0
  %1136 = vmatprep.subr.mxu0 0.0
  %1137 = vmatpush1.msra.mxu0 0.0
  %1138 = vmatprep.subr.mxu0 0.0
  %1139 = vmatpush1.msra.mxu0 0.0
  %1140 = vmatprep.subr.mxu0 0.0
  %1141 = vmatpush1.msra.mxu0 0.0
  %1142 = vmatprep.subr.mxu0 0.0
  %1143 = vmatpush1.msra.mxu0 0.0
  %1144 = vmatprep.subr.mxu0 0.0
  %1145 = vmatpush1.msra.mxu0 0.0
  %1146 = vmatprep.subr.mxu0 0.0
  %1147 = vmatpush1.msra.mxu0 0.0
  %1148 = vmatprep.subr.mxu0 0.0
  %1149 = vmatpush1.msra.mxu0 0.0
  %1150 = vmatprep.subr.mxu0 0.0
  %1151 = vmatpush1.msra.mxu0 0.0
  %1152 = vmatprep.subr.mxu0 0.0
  %1153 = vmatpush1.msra.mxu0 0.0
  %1154 = vmatprep.subr.mxu0 0.0
  %1155 = vmatpush1.msra.mxu0 0.0
  %1156 = vmatprep.subr.mxu0 0.0
  %1157 = vmatpush1.msra.mxu0 0.0
  %1158 = vmatprep.subr.mxu0 0.0
  %1159 = vmatpush1.msra.mxu0 0.0
  %1160 = vmatprep.subr.mxu0 0.0
  %1161 = vmatpush1.msra.mxu0 0.0
  %1162 = vmatprep.subr.mxu0 0.0
  %1163 = vmatpush1.msra.mxu0 0.0
  %1164 = vmatprep.subr.mxu0 0.0
  %1165 = vmatpush1.msra.mxu0 0.0
  %1166 = vmatprep.subr.mxu0 0.0
  %1167 = vmatpush1.msra.mxu0 0.0
  %1168 = vmatprep.subr.mxu0 0.0
  %1169 = vmatpush1.msra.mxu0 0.0
  %1170 = vmatprep.subr.mxu0 0.0
  %1171 = vmatpush1.msra.mxu0 0.0
  %1172 = vmatprep.subr.mxu0 0.0
  %1173 = vmatpush1.msra.mxu0 0.0
  %1174 = vmatprep.mubr.f32.mxu0 0.0
  %1175 = vmatmul.mubr.f32.gmra.mrb[0].mxu0 %v1108
  %v1176 = vpop.f32.mrb[0].mxu0
  %v1177 = vadd.f32 0.0, %v1176
  %v1178 = vpop.f32.mrb[0].mxu0
  %1179 = vdwg.mxu0
  %v1181 = vsel %vm36, %v732, 0
  %1183 = vmatprep.subr.mxu0 0.0
  %1184 = vmatpush1.msra.mxu0 %v740
  %1185 = vmatprep.subr.mxu0 0.0
  %1186 = vmatpush1.msra.mxu0 0.0
  %1187 = vmatprep.subr.mxu0 0.0
  %1188 = vmatpush1.msra.mxu0 0.0
  %1189 = vmatprep.subr.mxu0 0.0
  %1190 = vmatpush1.msra.mxu0 0.0
  %1191 = vmatprep.subr.mxu0 0.0
  %1192 = vmatpush1.msra.mxu0 0.0
  %1193 = vmatprep.subr.mxu0 0.0
  %1194 = vmatpush1.msra.mxu0 0.0
  %1195 = vmatprep.subr.mxu0 0.0
  %1196 = vmatpush1.msra.mxu0 0.0
  %1197 = vmatprep.subr.mxu0 0.0
  %1198 = vmatpush1.msra.mxu0 0.0
  %1199 = vmatprep.subr.mxu0 0.0
  %1200 = vmatpush1.msra.mxu0 0.0
  %1201 = vmatprep.subr.mxu0 0.0
  %1202 = vmatpush1.msra.mxu0 0.0
  %1203 = vmatprep.subr.mxu0 0.0
  %1204 = vmatpush1.msra.mxu0 0.0
  %1205 = vmatprep.subr.mxu0 0.0
  %1206 = vmatpush1.msra.mxu0 0.0
  %1207 = vmatprep.subr.mxu0 0.0
  %1208 = vmatpush1.msra.mxu0 0.0
  %1209 = vmatprep.subr.mxu0 0.0
  %1210 = vmatpush1.msra.mxu0 0.0
  %1211 = vmatprep.subr.mxu0 0.0
  %1212 = vmatpush1.msra.mxu0 0.0
  %1213 = vmatprep.subr.mxu0 0.0
  %1214 = vmatpush1.msra.mxu0 0.0
  %1215 = vmatprep.subr.mxu0 0.0
  %1216 = vmatpush1.msra.mxu0 0.0
  %1217 = vmatprep.subr.mxu0 0.0
  %1218 = vmatpush1.msra.mxu0 0.0
  %1219 = vmatprep.subr.mxu0 0.0
  %1220 = vmatpush1.msra.mxu0 0.0
  %1221 = vmatprep.subr.mxu0 0.0
  %1222 = vmatpush1.msra.mxu0 0.0
  %1223 = vmatprep.subr.mxu0 0.0
  %1224 = vmatpush1.msra.mxu0 0.0
  %1225 = vmatprep.subr.mxu0 0.0
  %1226 = vmatpush1.msra.mxu0 0.0
  %1227 = vmatprep.subr.mxu0 0.0
  %1228 = vmatpush1.msra.mxu0 0.0
  %1229 = vmatprep.subr.mxu0 0.0
  %1230 = vmatpush1.msra.mxu0 0.0
  %1231 = vmatprep.subr.mxu0 0.0
  %1232 = vmatpush1.msra.mxu0 0.0
  %1233 = vmatprep.subr.mxu0 0.0
  %1234 = vmatpush1.msra.mxu0 0.0
  %1235 = vmatprep.subr.mxu0 0.0
  %1236 = vmatpush1.msra.mxu0 0.0
  %1237 = vmatprep.subr.mxu0 0.0
  %1238 = vmatpush1.msra.mxu0 0.0
  %1239 = vmatprep.subr.mxu0 0.0
  %1240 = vmatpush1.msra.mxu0 0.0
  %1241 = vmatprep.subr.mxu0 0.0
  %1242 = vmatpush1.msra.mxu0 0.0
  %1243 = vmatprep.subr.mxu0 0.0
  %1244 = vmatpush1.msra.mxu0 0.0
  %1245 = vmatprep.subr.mxu0 0.0
  %1246 = vmatpush1.msra.mxu0 0.0
  %1247 = vmatprep.mubr.f32.mxu0 0.0
  %1248 = vmatmul.mubr.f32.gmra.mrb[0].mxu0 %v1181
  %v1249 = vpop.f32.mrb[0].mxu0
  %v1250 = vadd.f32 0.0, %v1249
  %v1251 = vpop.f32.mrb[0].mxu0
  %1252 = vdwg.mxu0
  %v1254 = vsel %vm36, %v733, 0
  %1256 = vmatprep.subr.mxu0 0.0
  %1257 = vmatpush1.msra.mxu0 %v741
  %1258 = vmatprep.subr.mxu0 0.0
  %1259 = vmatpush1.msra.mxu0 0.0
  %1260 = vmatprep.subr.mxu0 0.0
  %1261 = vmatpush1.msra.mxu0 0.0
  %1262 = vmatprep.subr.mxu0 0.0
  %1263 = vmatpush1.msra.mxu0 0.0
  %1264 = vmatprep.subr.mxu0 0.0
  %1265 = vmatpush1.msra.mxu0 0.0
  %1266 = vmatprep.subr.mxu0 0.0
  %1267 = vmatpush1.msra.mxu0 0.0
  %1268 = vmatprep.subr.mxu0 0.0
  %1269 = vmatpush1.msra.mxu0 0.0
  %1270 = vmatprep.subr.mxu0 0.0
  %1271 = vmatpush1.msra.mxu0 0.0
  %1272 = vmatprep.subr.mxu0 0.0
  %1273 = vmatpush1.msra.mxu0 0.0
  %1274 = vmatprep.subr.mxu0 0.0
  %1275 = vmatpush1.msra.mxu0 0.0
  %1276 = vmatprep.subr.mxu0 0.0
  %1277 = vmatpush1.msra.mxu0 0.0
  %1278 = vmatprep.subr.mxu0 0.0
  %1279 = vmatpush1.msra.mxu0 0.0
  %1280 = vmatprep.subr.mxu0 0.0
  %1281 = vmatpush1.msra.mxu0 0.0
  %1282 = vmatprep.subr.mxu0 0.0
  %1283 = vmatpush1.msra.mxu0 0.0
  %1284 = vmatprep.subr.mxu0 0.0
  %1285 = vmatpush1.msra.mxu0 0.0
  %1286 = vmatprep.subr.mxu0 0.0
  %1287 = vmatpush1.msra.mxu0 0.0
  %1288 = vmatprep.subr.mxu0 0.0
  %1289 = vmatpush1.msra.mxu0 0.0
  %1290 = vmatprep.subr.mxu0 0.0
  %1291 = vmatpush1.msra.mxu0 0.0
  %1292 = vmatprep.subr.mxu0 0.0
  %1293 = vmatpush1.msra.mxu0 0.0
  %1294 = vmatprep.subr.mxu0 0.0
  %1295 = vmatpush1.msra.mxu0 0.0
  %1296 = vmatprep.subr.mxu0 0.0
  %1297 = vmatpush1.msra.mxu0 0.0
  %1298 = vmatprep.subr.mxu0 0.0
  %1299 = vmatpush1.msra.mxu0 0.0
  %1300 = vmatprep.subr.mxu0 0.0
  %1301 = vmatpush1.msra.mxu0 0.0
  %1302 = vmatprep.subr.mxu0 0.0
  %1303 = vmatpush1.msra.mxu0 0.0
  %1304 = vmatprep.subr.mxu0 0.0
  %1305 = vmatpush1.msra.mxu0 0.0
  %1306 = vmatprep.subr.mxu0 0.0
  %1307 = vmatpush1.msra.mxu0 0.0
  %1308 = vmatprep.subr.mxu0 0.0
  %1309 = vmatpush1.msra.mxu0 0.0
  %1310 = vmatprep.subr.mxu0 0.0
  %1311 = vmatpush1.msra.mxu0 0.0
  %1312 = vmatprep.subr.mxu0 0.0
  %1313 = vmatpush1.msra.mxu0 0.0
  %1314 = vmatprep.subr.mxu0 0.0
  %1315 = vmatpush1.msra.mxu0 0.0
  %1316 = vmatprep.subr.mxu0 0.0
  %1317 = vmatpush1.msra.mxu0 0.0
  %1318 = vmatprep.subr.mxu0 0.0
  %1319 = vmatpush1.msra.mxu0 0.0
  %1320 = vmatprep.mubr.f32.mxu0 0.0
  %1321 = vmatmul.mubr.f32.gmra.mrb[0].mxu0 %v1254
  %v1322 = vpop.f32.mrb[0].mxu0
  %v1323 = vadd.f32 0.0, %v1322
  %v1324 = vpop.f32.mrb[0].mxu0
  %1325 = vdwg.mxu0
  %1326 = vst.msk [vmem:[%s5] sm:$0xff] %vm36, %v812
  %1327 = vst.msk [vmem:[%s5 + $0x8] sm:$0xff] %vm36, %v885
  %1328 = vst.msk [vmem:[%s5 + $0x10] sm:$0xff] %vm36, %v958
  %1329 = vst.msk [vmem:[%s5 + $0x18] sm:$0xff] %vm36, %v1031
  %1330 = vst.msk [vmem:[%s5 + $0x20] sm:$0xff] %vm36, %v1104
  %1331 = vst.msk [vmem:[%s5 + $0x28] sm:$0xff] %vm36, %v1177
  %1332 = vst.msk [vmem:[%s5 + $0x30] sm:$0xff] %vm36, %v1250
  %1333 = vst.msk [vmem:[%s5 + $0x38] sm:$0xff] %vm36, %v1323
  // Predicated region
  $region22: #{_forward_impl.4} parent=0 // pred_check
    _
  $region23: #{_forward_impl.4} parent=0 // pred_check_branch
    %1335 = sbr.rel (0) target = $region25
  $region24: #{_forward_impl.4} parent=0 // pred_region
    _
  $region25: #{_forward_impl.4} parent=0 // pred_fallthru
    _
  // Predicated region
  $region26: #{_forward_impl.4} parent=0 // pred_check
    _
  $region27: #{_forward_impl.4} parent=0 // pred_check_branch
    %1337 = sbr.rel (0) target = $region29
  $region28: #{_forward_impl.4} parent=0 // pred_region
    _
  $region29: #{_forward_impl.4} parent=0 // pred_fallthru
    _

</llo_original>
